<compile_context>
chip_gen: v6e
topology: v6e:2x2x1
jax: 0.10.0
libtpu: 0.0.40
codegen_flags: <defaults>
</compile_context>

<pallas_src>
import functools

import jax
import jax.numpy as jnp
from jax.experimental import pallas as pl
from jax.experimental.pallas import tpu as pltpu

LANE = 128      # pad every feature dim to a multiple of the 128-lane vreg width
SUBLANE = 8     # pad batch to a multiple of the sublane width


def _round_up(n, m):
    return ((n + m - 1) // m) * m


def _leaky_relu(y):
    return jnp.where(y > 0, y, jnp.float32(0.01) * y)   # nn.LeakyReLU default slope


# ----------------------------- fused Pallas kernel -----------------------------

def _fused_forward_kernel(x_ref, *refs, plan):
    """Whole ResidualUnetAE forward for one batch tile, fully unrolled.

    refs = (param_ref_0, ..., param_ref_{P-1}, out_ref).  `plan` is a static
    per-block description indexing into the param refs:
      plan[b] = (enc_plan, dec_plan)
        enc_plan[i] = (wa_idx, bias_idx)                        # Linear + LeakyReLU
        dec_plan[j] = (wa_idx, wb_idx_or_None, bias_idx, act)   # split-weight skip fusion
    All weights are (in, out), zero-padded to lane-dense multiples of 128.
    """
    out_ref = refs[-1]
    p = refs[:-1]

    x_in = x_ref[...].astype(jnp.float32)
    x_out = None
    for blk_idx, (enc_plan, dec_plan) in enumerate(plan):
        if blk_idx > 0:
            x_in = x_in + x_out          # cross-block residual (block 0: +0 skipped)

        # ---- encoder: Linear + LeakyReLU per layer ----
        h = x_in
        enc_outs = []
        for wa_i, b_i in enc_plan:
            y = jnp.dot(h, p[wa_i][...], preferred_element_type=jnp.float32)
            y = y + p[b_i][...]
            h = _leaky_relu(y)
            # TODO(synk): nn.Dropout (training mode) omitted; eval-mode identity.
            enc_outs.append(h)

        # ---- decoder: skip fusion folded into split-weight matmuls ----
        L = len(enc_plan)
        for j, (wa_i, wb_i, b_i, act) in enumerate(dec_plan):
            y = jnp.dot(h, p[wa_i][...], preferred_element_type=jnp.float32)
            if wb_i is not None:
                # concat: [x, skip] @ W == x @ W[:d] + skip @ W[d:]
                # add:    (x + skip) @ W == x @ W + skip @ W
                skip = enc_outs[L - 1 - j]
                y = y + jnp.dot(skip, p[wb_i][...],
                                preferred_element_type=jnp.float32)
            y = y + p[b_i][...]
            if act == "leaky_relu":
                y = _leaky_relu(y)
            elif act == "relu":
                y = jnp.maximum(y, jnp.float32(0.0))
            h = y

        x_out = h
        out_ref[blk_idx] = x_out.astype(out_ref.dtype)   # single lane-dense store/block


# ------------------------- parameter construction -------------------------

def init_params(key, layers, n_blocks, input_dim, fusion):
    """Deterministic synthetic weights matching ResidualUnetAE.__init__ shapes.

    Weights are stored pre-transposed as (in, out); decoder entries carry their
    activation tag ('leaky_relu' / 'relu' / None).
    """
    expand = 2 if fusion == "concat" else 1
    L = len(layers)
    params = []
    for _blk in range(n_blocks):
        # encoder: Linear(input_dim->layers[0]) ... Linear(layers[-2]->layers[-1])
        enc = []
        din = input_dim
        for dout in layers:
            key, k1, k2 = jax.random.split(key, 3)
            w = jax.random.normal(k1, (din, dout), jnp.float32) / jnp.sqrt(
                jnp.float32(din))
            bb = 0.01 * jax.random.normal(k2, (dout,), jnp.float32)
            enc.append((w, bb))
            din = dout
        # decoder dims/activations (mirrors get_decoder)
        dec_dims = [(layers[L - 1], layers[L - 2], None)]               # first: no act
        for j in range(1, L - 1):
            dec_dims.append((layers[L - 1 - j] * expand, layers[L - 2 - j],
                             "leaky_relu"))
        dec_dims.append((layers[0] * expand, input_dim, "relu"))        # last: ReLU
        dec = []
        for din_d, dout_d, act in dec_dims:
            key, k1, k2 = jax.random.split(key, 3)
            w = jax.random.normal(k1, (din_d, dout_d), jnp.float32) / jnp.sqrt(
                jnp.float32(din_d))
            bb = 0.01 * jax.random.normal(k2, (dout_d,), jnp.float32)
            dec.append((w, bb, act))
        params.append((enc, dec))
    return params


def _pad2(a, rows, cols):
    r, c = a.shape
    return jnp.pad(a, ((0, rows - r), (0, cols - c)))


def build_fused_params(params, layers, fusion):
    """Flatten + zero-pad all per-layer weights/biases; emit the static plan."""
    L = len(layers)
    flat, plan = [], []

    def add(a):
        flat.append(a)
        return len(flat) - 1

    for enc, dec in params:
        enc_plan = []
        for w, b in enc:
            din, dout = w.shape
            wa = _pad2(w, _round_up(din, LANE), _round_up(dout, LANE))
            bb = _pad2(b.reshape(1, -1), 1, _round_up(dout, LANE))
            enc_plan.append((add(wa), add(bb)))
        dec_plan = []
        for j, (w, b, act) in enumerate(dec):
            din, dout = w.shape
            dout_p = _round_up(dout, LANE)
            bb = _pad2(b.reshape(1, -1), 1, dout_p)
            if j == 0:                                   # no skip on first decoder layer
                wa = _pad2(w, _round_up(din, LANE), dout_p)
                dec_plan.append((add(wa), None, add(bb), act))
            else:
                d_skip = layers[L - 1 - j]
                if fusion == "concat":
                    w_a, w_b = w[: din - d_skip, :], w[din - d_skip:, :]
                else:                                    # 'add'
                    w_a, w_b = w, w
                wa = _pad2(w_a, _round_up(w_a.shape[0], LANE), dout_p)
                wb = _pad2(w_b, _round_up(w_b.shape[0], LANE), dout_p)
                dec_plan.append((add(wa), add(wb), add(bb), act))
        plan.append((enc_plan, dec_plan))
    return flat, plan


# ------------------------------ forward pass ------------------------------

def residual_unet_ae_forward(x, params, layers, fusion, *, batch_tile=512):
    """Mirrors ResidualUnetAE.forward: returns (x_out, {block_idx: x_out_i})."""
    B, input_dim = x.shape
    n_blocks = len(params)
    d_in_p = _round_up(input_dim, LANE)

    flat, plan = build_fused_params(params, layers, fusion)

    # batch padding / tiling (one tile for small B; grid-parallel for big B)
    bt = min(_round_up(B, SUBLANE), batch_tile)
    B_p = _round_up(B, bt)
    x_p = jnp.pad(x, ((0, B_p - B), (0, d_in_p - input_dim)))

    grid = (B_p // bt,)
    in_specs = [pl.BlockSpec((bt, d_in_p), lambda i: (i, 0))]
    for a in flat:
        # constant block index -> weights/biases stay VMEM-resident across tiles
        in_specs.append(pl.BlockSpec(a.shape, lambda i: (0, 0)))
    out_spec = pl.BlockSpec((n_blocks, bt, d_in_p), lambda i: (0, i, 0))

    out = pl.pallas_call(
        functools.partial(_fused_forward_kernel, plan=plan),
        out_shape=jax.ShapeDtypeStruct((n_blocks, B_p, d_in_p), jnp.float32),
        grid=grid,
        in_specs=in_specs,
        out_specs=out_spec,
        compiler_params=pltpu.CompilerParams(
            dimension_semantics=("parallel",)),     # megacore split on v7x
    )(x_p, *flat)

    out = out[:, :B, :input_dim]
    x_out = out[n_blocks - 1]
    output = {i: out[i] for i in range(n_blocks)}
    return x_out, output


# ---------------------- pure-JAX reference (for checking) ----------------------

def reference_forward(x, params, layers, fusion):
    L = len(layers)
    x_in = x
    x_out = jnp.zeros_like(x)
    output = {}
    for i, (enc, dec) in enumerate(params):
        x_in = x_in + x_out
        h = x_in
        enc_outs = []
        for w, b in enc:
            h = _leaky_relu(h @ w + b)
            enc_outs.append(h)
        for j, (w, b, act) in enumerate(dec):
            if j > 0:
                skip = enc_outs[L - 1 - j]
                if fusion == "concat":
                    h = jnp.concatenate([h, skip], axis=-1)
                else:
                    h = h + skip
            h = h @ w + b
            if act == "leaky_relu":
                h = _leaky_relu(h)
            elif act == "relu":
                h = jnp.maximum(h, 0.0)
        x_out = h
        output[i] = x_out
    return x_out, output


# ---------------------------------- main -----------------------------------

if __name__ == "__main__":
    B = 8
    input_dim = 16
    layers = [32, 16, 8]     # half of the symmetric U-Net, as in the PyTorch module
    n_blocks = 2
    fusion = "concat"

    key = jax.random.PRNGKey(0)
    key, kx, kp = jax.random.split(key, 3)
    x = jax.random.normal(kx, (B, input_dim), jnp.float32)
    params = init_params(kp, layers, n_blocks, input_dim, fusion)

    x_out, output = residual_unet_ae_forward(x, params, layers, fusion)
    jax.block_until_ready(x_out)
    for v in output.values():
        jax.block_until_ready(v)

    # spot-check the fused kernel against a pure-JAX reference of the same math
    ref_out, ref_dict = reference_forward(x, params, layers, fusion)
    assert x_out.shape == (B, input_dim)
    assert jnp.allclose(x_out, ref_out, atol=1e-4, rtol=1e-4)
    for i in range(n_blocks):
        assert output[i].shape == (B, input_dim)
        assert jnp.allclose(output[i], ref_dict[i], atol=1e-4, rtol=1e-4)

    print("KERNEL_OK")
</pallas_src>

<mosaic_0001>
module attributes {stable_mosaic.version = 11 : i64} {
  func.func @_fused_forward_kernel(%arg0: i32, %arg1: memref<8x128xf32, #tpu.memory_space<vmem>>, %arg2: memref<128x128xf32, #tpu.memory_space<vmem>>, %arg3: memref<1x128xf32, #tpu.memory_space<vmem>>, %arg4: memref<128x128xf32, #tpu.memory_space<vmem>>, %arg5: memref<1x128xf32, #tpu.memory_space<vmem>>, %arg6: memref<128x128xf32, #tpu.memory_space<vmem>>, %arg7: memref<1x128xf32, #tpu.memory_space<vmem>>, %arg8: memref<128x128xf32, #tpu.memory_space<vmem>>, %arg9: memref<1x128xf32, #tpu.memory_space<vmem>>, %arg10: memref<128x128xf32, #tpu.memory_space<vmem>>, %arg11: memref<128x128xf32, #tpu.memory_space<vmem>>, %arg12: memref<1x128xf32, #tpu.memory_space<vmem>>, %arg13: memref<128x128xf32, #tpu.memory_space<vmem>>, %arg14: memref<128x128xf32, #tpu.memory_space<vmem>>, %arg15: memref<1x128xf32, #tpu.memory_space<vmem>>, %arg16: memref<128x128xf32, #tpu.memory_space<vmem>>, %arg17: memref<1x128xf32, #tpu.memory_space<vmem>>, %arg18: memref<128x128xf32, #tpu.memory_space<vmem>>, %arg19: memref<1x128xf32, #tpu.memory_space<vmem>>, %arg20: memref<128x128xf32, #tpu.memory_space<vmem>>, %arg21: memref<1x128xf32, #tpu.memory_space<vmem>>, %arg22: memref<128x128xf32, #tpu.memory_space<vmem>>, %arg23: memref<1x128xf32, #tpu.memory_space<vmem>>, %arg24: memref<128x128xf32, #tpu.memory_space<vmem>>, %arg25: memref<128x128xf32, #tpu.memory_space<vmem>>, %arg26: memref<1x128xf32, #tpu.memory_space<vmem>>, %arg27: memref<128x128xf32, #tpu.memory_space<vmem>>, %arg28: memref<128x128xf32, #tpu.memory_space<vmem>>, %arg29: memref<1x128xf32, #tpu.memory_space<vmem>>, %arg30: memref<2x8x128xf32, #tpu.memory_space<vmem>>) attributes {dimension_semantics = [#tpu.dimension_semantics<parallel>], iteration_bounds = array<i64: 1>, scalar_prefetch = 0 : i64, scratch_operands = 0 : i64, tpu.core_type = #tpu.core_type<tc>, window_params = [{transform_indices = @transform_0, window_bounds = array<i64: 8, 128>}, {pipeline_mode = #tpu.pipeline_mode<synchronous>, transform_indices = @transform_1, window_bounds = array<i64: 128, 128>}, {pipeline_mode = #tpu.pipeline_mode<synchronous>, transform_indices = @transform_2, window_bounds = array<i64: 1, 128>}, {pipeline_mode = #tpu.pipeline_mode<synchronous>, transform_indices = @transform_3, window_bounds = array<i64: 128, 128>}, {pipeline_mode = #tpu.pipeline_mode<synchronous>, transform_indices = @transform_4, window_bounds = array<i64: 1, 128>}, {pipeline_mode = #tpu.pipeline_mode<synchronous>, transform_indices = @transform_5, window_bounds = array<i64: 128, 128>}, {pipeline_mode = #tpu.pipeline_mode<synchronous>, transform_indices = @transform_6, window_bounds = array<i64: 1, 128>}, {pipeline_mode = #tpu.pipeline_mode<synchronous>, transform_indices = @transform_7, window_bounds = array<i64: 128, 128>}, {pipeline_mode = #tpu.pipeline_mode<synchronous>, transform_indices = @transform_8, window_bounds = array<i64: 1, 128>}, {pipeline_mode = #tpu.pipeline_mode<synchronous>, transform_indices = @transform_9, window_bounds = array<i64: 128, 128>}, {pipeline_mode = #tpu.pipeline_mode<synchronous>, transform_indices = @transform_10, window_bounds = array<i64: 128, 128>}, {pipeline_mode = #tpu.pipeline_mode<synchronous>, transform_indices = @transform_11, window_bounds = array<i64: 1, 128>}, {pipeline_mode = #tpu.pipeline_mode<synchronous>, transform_indices = @transform_12, window_bounds = array<i64: 128, 128>}, {pipeline_mode = #tpu.pipeline_mode<synchronous>, transform_indices = @transform_13, window_bounds = array<i64: 128, 128>}, {pipeline_mode = #tpu.pipeline_mode<synchronous>, transform_indices = @transform_14, window_bounds = array<i64: 1, 128>}, {pipeline_mode = #tpu.pipeline_mode<synchronous>, transform_indices = @transform_15, window_bounds = array<i64: 128, 128>}, {pipeline_mode = #tpu.pipeline_mode<synchronous>, transform_indices = @transform_16, window_bounds = array<i64: 1, 128>}, {pipeline_mode = #tpu.pipeline_mode<synchronous>, transform_indices = @transform_17, window_bounds = array<i64: 128, 128>}, {pipeline_mode = #tpu.pipeline_mode<synchronous>, transform_indices = @transform_18, window_bounds = array<i64: 1, 128>}, {pipeline_mode = #tpu.pipeline_mode<synchronous>, transform_indices = @transform_19, window_bounds = array<i64: 128, 128>}, {pipeline_mode = #tpu.pipeline_mode<synchronous>, transform_indices = @transform_20, window_bounds = array<i64: 1, 128>}, {pipeline_mode = #tpu.pipeline_mode<synchronous>, transform_indices = @transform_21, window_bounds = array<i64: 128, 128>}, {pipeline_mode = #tpu.pipeline_mode<synchronous>, transform_indices = @transform_22, window_bounds = array<i64: 1, 128>}, {pipeline_mode = #tpu.pipeline_mode<synchronous>, transform_indices = @transform_23, window_bounds = array<i64: 128, 128>}, {pipeline_mode = #tpu.pipeline_mode<synchronous>, transform_indices = @transform_24, window_bounds = array<i64: 128, 128>}, {pipeline_mode = #tpu.pipeline_mode<synchronous>, transform_indices = @transform_25, window_bounds = array<i64: 1, 128>}, {pipeline_mode = #tpu.pipeline_mode<synchronous>, transform_indices = @transform_26, window_bounds = array<i64: 128, 128>}, {pipeline_mode = #tpu.pipeline_mode<synchronous>, transform_indices = @transform_27, window_bounds = array<i64: 128, 128>}, {pipeline_mode = #tpu.pipeline_mode<synchronous>, transform_indices = @transform_28, window_bounds = array<i64: 1, 128>}, {transform_indices = @transform_29, window_bounds = array<i64: 2, 8, 128>}]} {
    %c0 = arith.constant 0 : index
    %c0_0 = arith.constant 0 : index
    %0 = vector.load %arg1[%c0, %c0_0] : memref<8x128xf32, #tpu.memory_space<vmem>>, vector<8x128xf32>
    %c0_1 = arith.constant 0 : index
    %c0_2 = arith.constant 0 : index
    %1 = vector.load %arg2[%c0_1, %c0_2] : memref<128x128xf32, #tpu.memory_space<vmem>>, vector<128x128xf32>
    %cst = arith.constant dense<0.000000e+00> : vector<8x128xf32>
    %2 = tpu.matmul %0, %1, %cst {dimension_numbers = #tpu.dot_dimension_numbers<[1], [0], [0], [1], [0, 0, 1, 1], [], []>} : vector<8x128xf32>, vector<128x128xf32>, vector<8x128xf32> -> vector<8x128xf32>
    %c0_3 = arith.constant 0 : index
    %c0_4 = arith.constant 0 : index
    %3 = vector.load %arg3[%c0_3, %c0_4] : memref<1x128xf32, #tpu.memory_space<vmem>>, vector<1x128xf32>
    %4 = vector.broadcast %3 : vector<1x128xf32> to vector<8x128xf32>
    %5 = arith.addf %2, %4 : vector<8x128xf32>
    %cst_5 = arith.constant 0.000000e+00 : f32
    %6 = vector.broadcast %cst_5 : f32 to vector<8x128xf32>
    %7 = arith.cmpf ogt, %5, %6 : vector<8x128xf32>
    %cst_6 = arith.constant 0.00999999977 : f32
    %8 = vector.broadcast %cst_6 : f32 to vector<8x128xf32>
    %9 = arith.mulf %8, %5 : vector<8x128xf32>
    %10 = arith.select %7, %5, %9 : vector<8x128xi1>, vector<8x128xf32>
    %c0_7 = arith.constant 0 : index
    %c0_8 = arith.constant 0 : index
    %11 = vector.load %arg4[%c0_7, %c0_8] : memref<128x128xf32, #tpu.memory_space<vmem>>, vector<128x128xf32>
    %cst_9 = arith.constant dense<0.000000e+00> : vector<8x128xf32>
    %12 = tpu.matmul %10, %11, %cst_9 {dimension_numbers = #tpu.dot_dimension_numbers<[1], [0], [0], [1], [0, 0, 1, 1], [], []>} : vector<8x128xf32>, vector<128x128xf32>, vector<8x128xf32> -> vector<8x128xf32>
    %c0_10 = arith.constant 0 : index
    %c0_11 = arith.constant 0 : index
    %13 = vector.load %arg5[%c0_10, %c0_11] : memref<1x128xf32, #tpu.memory_space<vmem>>, vector<1x128xf32>
    %14 = vector.broadcast %13 : vector<1x128xf32> to vector<8x128xf32>
    %15 = arith.addf %12, %14 : vector<8x128xf32>
    %cst_12 = arith.constant 0.000000e+00 : f32
    %16 = vector.broadcast %cst_12 : f32 to vector<8x128xf32>
    %17 = arith.cmpf ogt, %15, %16 : vector<8x128xf32>
    %cst_13 = arith.constant 0.00999999977 : f32
    %18 = vector.broadcast %cst_13 : f32 to vector<8x128xf32>
    %19 = arith.mulf %18, %15 : vector<8x128xf32>
    %20 = arith.select %17, %15, %19 : vector<8x128xi1>, vector<8x128xf32>
    %c0_14 = arith.constant 0 : index
    %c0_15 = arith.constant 0 : index
    %21 = vector.load %arg6[%c0_14, %c0_15] : memref<128x128xf32, #tpu.memory_space<vmem>>, vector<128x128xf32>
    %cst_16 = arith.constant dense<0.000000e+00> : vector<8x128xf32>
    %22 = tpu.matmul %20, %21, %cst_16 {dimension_numbers = #tpu.dot_dimension_numbers<[1], [0], [0], [1], [0, 0, 1, 1], [], []>} : vector<8x128xf32>, vector<128x128xf32>, vector<8x128xf32> -> vector<8x128xf32>
    %c0_17 = arith.constant 0 : index
    %c0_18 = arith.constant 0 : index
    %23 = vector.load %arg7[%c0_17, %c0_18] : memref<1x128xf32, #tpu.memory_space<vmem>>, vector<1x128xf32>
    %24 = vector.broadcast %23 : vector<1x128xf32> to vector<8x128xf32>
    %25 = arith.addf %22, %24 : vector<8x128xf32>
    %cst_19 = arith.constant 0.000000e+00 : f32
    %26 = vector.broadcast %cst_19 : f32 to vector<8x128xf32>
    %27 = arith.cmpf ogt, %25, %26 : vector<8x128xf32>
    %cst_20 = arith.constant 0.00999999977 : f32
    %28 = vector.broadcast %cst_20 : f32 to vector<8x128xf32>
    %29 = arith.mulf %28, %25 : vector<8x128xf32>
    %30 = arith.select %27, %25, %29 : vector<8x128xi1>, vector<8x128xf32>
    %c0_21 = arith.constant 0 : index
    %c0_22 = arith.constant 0 : index
    %31 = vector.load %arg8[%c0_21, %c0_22] : memref<128x128xf32, #tpu.memory_space<vmem>>, vector<128x128xf32>
    %cst_23 = arith.constant dense<0.000000e+00> : vector<8x128xf32>
    %32 = tpu.matmul %30, %31, %cst_23 {dimension_numbers = #tpu.dot_dimension_numbers<[1], [0], [0], [1], [0, 0, 1, 1], [], []>} : vector<8x128xf32>, vector<128x128xf32>, vector<8x128xf32> -> vector<8x128xf32>
    %c0_24 = arith.constant 0 : index
    %c0_25 = arith.constant 0 : index
    %33 = vector.load %arg9[%c0_24, %c0_25] : memref<1x128xf32, #tpu.memory_space<vmem>>, vector<1x128xf32>
    %34 = vector.broadcast %33 : vector<1x128xf32> to vector<8x128xf32>
    %35 = arith.addf %32, %34 : vector<8x128xf32>
    %c0_26 = arith.constant 0 : index
    %c0_27 = arith.constant 0 : index
    %36 = vector.load %arg10[%c0_26, %c0_27] : memref<128x128xf32, #tpu.memory_space<vmem>>, vector<128x128xf32>
    %cst_28 = arith.constant dense<0.000000e+00> : vector<8x128xf32>
    %37 = tpu.matmul %35, %36, %cst_28 {dimension_numbers = #tpu.dot_dimension_numbers<[1], [0], [0], [1], [0, 0, 1, 1], [], []>} : vector<8x128xf32>, vector<128x128xf32>, vector<8x128xf32> -> vector<8x128xf32>
    %c0_29 = arith.constant 0 : index
    %c0_30 = arith.constant 0 : index
    %38 = vector.load %arg11[%c0_29, %c0_30] : memref<128x128xf32, #tpu.memory_space<vmem>>, vector<128x128xf32>
    %cst_31 = arith.constant dense<0.000000e+00> : vector<8x128xf32>
    %39 = tpu.matmul %20, %38, %cst_31 {dimension_numbers = #tpu.dot_dimension_numbers<[1], [0], [0], [1], [0, 0, 1, 1], [], []>} : vector<8x128xf32>, vector<128x128xf32>, vector<8x128xf32> -> vector<8x128xf32>
    %40 = arith.addf %37, %39 : vector<8x128xf32>
    %c0_32 = arith.constant 0 : index
    %c0_33 = arith.constant 0 : index
    %41 = vector.load %arg12[%c0_32, %c0_33] : memref<1x128xf32, #tpu.memory_space<vmem>>, vector<1x128xf32>
    %42 = vector.broadcast %41 : vector<1x128xf32> to vector<8x128xf32>
    %43 = arith.addf %40, %42 : vector<8x128xf32>
    %cst_34 = arith.constant 0.000000e+00 : f32
    %44 = vector.broadcast %cst_34 : f32 to vector<8x128xf32>
    %45 = arith.cmpf ogt, %43, %44 : vector<8x128xf32>
    %cst_35 = arith.constant 0.00999999977 : f32
    %46 = vector.broadcast %cst_35 : f32 to vector<8x128xf32>
    %47 = arith.mulf %46, %43 : vector<8x128xf32>
    %48 = arith.select %45, %43, %47 : vector<8x128xi1>, vector<8x128xf32>
    %c0_36 = arith.constant 0 : index
    %c0_37 = arith.constant 0 : index
    %49 = vector.load %arg13[%c0_36, %c0_37] : memref<128x128xf32, #tpu.memory_space<vmem>>, vector<128x128xf32>
    %cst_38 = arith.constant dense<0.000000e+00> : vector<8x128xf32>
    %50 = tpu.matmul %48, %49, %cst_38 {dimension_numbers = #tpu.dot_dimension_numbers<[1], [0], [0], [1], [0, 0, 1, 1], [], []>} : vector<8x128xf32>, vector<128x128xf32>, vector<8x128xf32> -> vector<8x128xf32>
    %c0_39 = arith.constant 0 : index
    %c0_40 = arith.constant 0 : index
    %51 = vector.load %arg14[%c0_39, %c0_40] : memref<128x128xf32, #tpu.memory_space<vmem>>, vector<128x128xf32>
    %cst_41 = arith.constant dense<0.000000e+00> : vector<8x128xf32>
    %52 = tpu.matmul %10, %51, %cst_41 {dimension_numbers = #tpu.dot_dimension_numbers<[1], [0], [0], [1], [0, 0, 1, 1], [], []>} : vector<8x128xf32>, vector<128x128xf32>, vector<8x128xf32> -> vector<8x128xf32>
    %53 = arith.addf %50, %52 : vector<8x128xf32>
    %c0_42 = arith.constant 0 : index
    %c0_43 = arith.constant 0 : index
    %54 = vector.load %arg15[%c0_42, %c0_43] : memref<1x128xf32, #tpu.memory_space<vmem>>, vector<1x128xf32>
    %55 = vector.broadcast %54 : vector<1x128xf32> to vector<8x128xf32>
    %56 = arith.addf %53, %55 : vector<8x128xf32>
    %cst_44 = arith.constant 0.000000e+00 : f32
    %57 = vector.broadcast %cst_44 : f32 to vector<8x128xf32>
    %58 = arith.maximumf %56, %57 : vector<8x128xf32>
    %c0_45 = arith.constant 0 : index
    %c0_46 = arith.constant 0 : index
    %c0_47 = arith.constant 0 : index
    %59 = vector.load %arg30[%c0_45, %c0_46, %c0_47] : memref<2x8x128xf32, #tpu.memory_space<vmem>>, vector<1x8x128xf32>
    %60 = vector.shape_cast %59 : vector<1x8x128xf32> to vector<8x128xf32>
    %61 = vector.shape_cast %58 : vector<8x128xf32> to vector<1x8x128xf32>
    tpu.vector_store %arg30[%c0_45, %c0_46, %c0_47], %61 {strides = array<i32>} : memref<2x8x128xf32, #tpu.memory_space<vmem>>, vector<1x8x128xf32>,
    %62 = arith.addf %0, %58 : vector<8x128xf32>
    %c0_48 = arith.constant 0 : index
    %c0_49 = arith.constant 0 : index
    %63 = vector.load %arg16[%c0_48, %c0_49] : memref<128x128xf32, #tpu.memory_space<vmem>>, vector<128x128xf32>
    %cst_50 = arith.constant dense<0.000000e+00> : vector<8x128xf32>
    %64 = tpu.matmul %62, %63, %cst_50 {dimension_numbers = #tpu.dot_dimension_numbers<[1], [0], [0], [1], [0, 0, 1, 1], [], []>} : vector<8x128xf32>, vector<128x128xf32>, vector<8x128xf32> -> vector<8x128xf32>
    %c0_51 = arith.constant 0 : index
    %c0_52 = arith.constant 0 : index
    %65 = vector.load %arg17[%c0_51, %c0_52] : memref<1x128xf32, #tpu.memory_space<vmem>>, vector<1x128xf32>
    %66 = vector.broadcast %65 : vector<1x128xf32> to vector<8x128xf32>
    %67 = arith.addf %64, %66 : vector<8x128xf32>
    %cst_53 = arith.constant 0.000000e+00 : f32
    %68 = vector.broadcast %cst_53 : f32 to vector<8x128xf32>
    %69 = arith.cmpf ogt, %67, %68 : vector<8x128xf32>
    %cst_54 = arith.constant 0.00999999977 : f32
    %70 = vector.broadcast %cst_54 : f32 to vector<8x128xf32>
    %71 = arith.mulf %70, %67 : vector<8x128xf32>
    %72 = arith.select %69, %67, %71 : vector<8x128xi1>, vector<8x128xf32>
    %c0_55 = arith.constant 0 : index
    %c0_56 = arith.constant 0 : index
    %73 = vector.load %arg18[%c0_55, %c0_56] : memref<128x128xf32, #tpu.memory_space<vmem>>, vector<128x128xf32>
    %cst_57 = arith.constant dense<0.000000e+00> : vector<8x128xf32>
    %74 = tpu.matmul %72, %73, %cst_57 {dimension_numbers = #tpu.dot_dimension_numbers<[1], [0], [0], [1], [0, 0, 1, 1], [], []>} : vector<8x128xf32>, vector<128x128xf32>, vector<8x128xf32> -> vector<8x128xf32>
    %c0_58 = arith.constant 0 : index
    %c0_59 = arith.constant 0 : index
    %75 = vector.load %arg19[%c0_58, %c0_59] : memref<1x128xf32, #tpu.memory_space<vmem>>, vector<1x128xf32>
    %76 = vector.broadcast %75 : vector<1x128xf32> to vector<8x128xf32>
    %77 = arith.addf %74, %76 : vector<8x128xf32>
    %cst_60 = arith.constant 0.000000e+00 : f32
    %78 = vector.broadcast %cst_60 : f32 to vector<8x128xf32>
    %79 = arith.cmpf ogt, %77, %78 : vector<8x128xf32>
    %cst_61 = arith.constant 0.00999999977 : f32
    %80 = vector.broadcast %cst_61 : f32 to vector<8x128xf32>
    %81 = arith.mulf %80, %77 : vector<8x128xf32>
    %82 = arith.select %79, %77, %81 : vector<8x128xi1>, vector<8x128xf32>
    %c0_62 = arith.constant 0 : index
    %c0_63 = arith.constant 0 : index
    %83 = vector.load %arg20[%c0_62, %c0_63] : memref<128x128xf32, #tpu.memory_space<vmem>>, vector<128x128xf32>
    %cst_64 = arith.constant dense<0.000000e+00> : vector<8x128xf32>
    %84 = tpu.matmul %82, %83, %cst_64 {dimension_numbers = #tpu.dot_dimension_numbers<[1], [0], [0], [1], [0, 0, 1, 1], [], []>} : vector<8x128xf32>, vector<128x128xf32>, vector<8x128xf32> -> vector<8x128xf32>
    %c0_65 = arith.constant 0 : index
    %c0_66 = arith.constant 0 : index
    %85 = vector.load %arg21[%c0_65, %c0_66] : memref<1x128xf32, #tpu.memory_space<vmem>>, vector<1x128xf32>
    %86 = vector.broadcast %85 : vector<1x128xf32> to vector<8x128xf32>
    %87 = arith.addf %84, %86 : vector<8x128xf32>
    %cst_67 = arith.constant 0.000000e+00 : f32
    %88 = vector.broadcast %cst_67 : f32 to vector<8x128xf32>
    %89 = arith.cmpf ogt, %87, %88 : vector<8x128xf32>
    %cst_68 = arith.constant 0.00999999977 : f32
    %90 = vector.broadcast %cst_68 : f32 to vector<8x128xf32>
    %91 = arith.mulf %90, %87 : vector<8x128xf32>
    %92 = arith.select %89, %87, %91 : vector<8x128xi1>, vector<8x128xf32>
    %c0_69 = arith.constant 0 : index
    %c0_70 = arith.constant 0 : index
    %93 = vector.load %arg22[%c0_69, %c0_70] : memref<128x128xf32, #tpu.memory_space<vmem>>, vector<128x128xf32>
    %cst_71 = arith.constant dense<0.000000e+00> : vector<8x128xf32>
    %94 = tpu.matmul %92, %93, %cst_71 {dimension_numbers = #tpu.dot_dimension_numbers<[1], [0], [0], [1], [0, 0, 1, 1], [], []>} : vector<8x128xf32>, vector<128x128xf32>, vector<8x128xf32> -> vector<8x128xf32>
    %c0_72 = arith.constant 0 : index
    %c0_73 = arith.constant 0 : index
    %95 = vector.load %arg23[%c0_72, %c0_73] : memref<1x128xf32, #tpu.memory_space<vmem>>, vector<1x128xf32>
    %96 = vector.broadcast %95 : vector<1x128xf32> to vector<8x128xf32>
    %97 = arith.addf %94, %96 : vector<8x128xf32>
    %c0_74 = arith.constant 0 : index
    %c0_75 = arith.constant 0 : index
    %98 = vector.load %arg24[%c0_74, %c0_75] : memref<128x128xf32, #tpu.memory_space<vmem>>, vector<128x128xf32>
    %cst_76 = arith.constant dense<0.000000e+00> : vector<8x128xf32>
    %99 = tpu.matmul %97, %98, %cst_76 {dimension_numbers = #tpu.dot_dimension_numbers<[1], [0], [0], [1], [0, 0, 1, 1], [], []>} : vector<8x128xf32>, vector<128x128xf32>, vector<8x128xf32> -> vector<8x128xf32>
    %c0_77 = arith.constant 0 : index
    %c0_78 = arith.constant 0 : index
    %100 = vector.load %arg25[%c0_77, %c0_78] : memref<128x128xf32, #tpu.memory_space<vmem>>, vector<128x128xf32>
    %cst_79 = arith.constant dense<0.000000e+00> : vector<8x128xf32>
    %101 = tpu.matmul %82, %100, %cst_79 {dimension_numbers = #tpu.dot_dimension_numbers<[1], [0], [0], [1], [0, 0, 1, 1], [], []>} : vector<8x128xf32>, vector<128x128xf32>, vector<8x128xf32> -> vector<8x128xf32>
    %102 = arith.addf %99, %101 : vector<8x128xf32>
    %c0_80 = arith.constant 0 : index
    %c0_81 = arith.constant 0 : index
    %103 = vector.load %arg26[%c0_80, %c0_81] : memref<1x128xf32, #tpu.memory_space<vmem>>, vector<1x128xf32>
    %104 = vector.broadcast %103 : vector<1x128xf32> to vector<8x128xf32>
    %105 = arith.addf %102, %104 : vector<8x128xf32>
    %cst_82 = arith.constant 0.000000e+00 : f32
    %106 = vector.broadcast %cst_82 : f32 to vector<8x128xf32>
    %107 = arith.cmpf ogt, %105, %106 : vector<8x128xf32>
    %cst_83 = arith.constant 0.00999999977 : f32
    %108 = vector.broadcast %cst_83 : f32 to vector<8x128xf32>
    %109 = arith.mulf %108, %105 : vector<8x128xf32>
    %110 = arith.select %107, %105, %109 : vector<8x128xi1>, vector<8x128xf32>
    %c0_84 = arith.constant 0 : index
    %c0_85 = arith.constant 0 : index
    %111 = vector.load %arg27[%c0_84, %c0_85] : memref<128x128xf32, #tpu.memory_space<vmem>>, vector<128x128xf32>
    %cst_86 = arith.constant dense<0.000000e+00> : vector<8x128xf32>
    %112 = tpu.matmul %110, %111, %cst_86 {dimension_numbers = #tpu.dot_dimension_numbers<[1], [0], [0], [1], [0, 0, 1, 1], [], []>} : vector<8x128xf32>, vector<128x128xf32>, vector<8x128xf32> -> vector<8x128xf32>
    %c0_87 = arith.constant 0 : index
    %c0_88 = arith.constant 0 : index
    %113 = vector.load %arg28[%c0_87, %c0_88] : memref<128x128xf32, #tpu.memory_space<vmem>>, vector<128x128xf32>
    %cst_89 = arith.constant dense<0.000000e+00> : vector<8x128xf32>
    %114 = tpu.matmul %72, %113, %cst_89 {dimension_numbers = #tpu.dot_dimension_numbers<[1], [0], [0], [1], [0, 0, 1, 1], [], []>} : vector<8x128xf32>, vector<128x128xf32>, vector<8x128xf32> -> vector<8x128xf32>
    %115 = arith.addf %112, %114 : vector<8x128xf32>
    %c0_90 = arith.constant 0 : index
    %c0_91 = arith.constant 0 : index
    %116 = vector.load %arg29[%c0_90, %c0_91] : memref<1x128xf32, #tpu.memory_space<vmem>>, vector<1x128xf32>
    %117 = vector.broadcast %116 : vector<1x128xf32> to vector<8x128xf32>
    %118 = arith.addf %115, %117 : vector<8x128xf32>
    %cst_92 = arith.constant 0.000000e+00 : f32
    %119 = vector.broadcast %cst_92 : f32 to vector<8x128xf32>
    %120 = arith.maximumf %118, %119 : vector<8x128xf32>
    %c1 = arith.constant 1 : index
    %c0_93 = arith.constant 0 : index
    %c0_94 = arith.constant 0 : index
    %121 = vector.load %arg30[%c1, %c0_93, %c0_94] : memref<2x8x128xf32, #tpu.memory_space<vmem>>, vector<1x8x128xf32>
    %122 = vector.shape_cast %121 : vector<1x8x128xf32> to vector<8x128xf32>
    %123 = vector.shape_cast %120 : vector<8x128xf32> to vector<1x8x128xf32>
    tpu.vector_store %arg30[%c1, %c0_93, %c0_94], %123 {strides = array<i32>} : memref<2x8x128xf32, #tpu.memory_space<vmem>>, vector<1x8x128xf32>,
    return
  }
  func.func @transform_0(%arg0: i32) -> (i32, i32) {
    %c0_i32 = arith.constant 0 : i32
    %c0_i32_0 = arith.constant 0 : i32
    return %arg0, %c0_i32 : i32, i32
  }
  func.func @transform_1(%arg0: i32) -> (i32, i32) {
    %c0_i32 = arith.constant 0 : i32
    %c0_i32_0 = arith.constant 0 : i32
    %c0_i32_1 = arith.constant 0 : i32
    return %c0_i32, %c0_i32_0 : i32, i32
  }
  func.func @transform_2(%arg0: i32) -> (i32, i32) {
    %c0_i32 = arith.constant 0 : i32
    %c0_i32_0 = arith.constant 0 : i32
    %c0_i32_1 = arith.constant 0 : i32
    return %c0_i32, %c0_i32_0 : i32, i32
  }
  func.func @transform_3(%arg0: i32) -> (i32, i32) {
    %c0_i32 = arith.constant 0 : i32
    %c0_i32_0 = arith.constant 0 : i32
    %c0_i32_1 = arith.constant 0 : i32
    return %c0_i32, %c0_i32_0 : i32, i32
  }
  func.func @transform_4(%arg0: i32) -> (i32, i32) {
    %c0_i32 = arith.constant 0 : i32
    %c0_i32_0 = arith.constant 0 : i32
    %c0_i32_1 = arith.constant 0 : i32
    return %c0_i32, %c0_i32_0 : i32, i32
  }
  func.func @transform_5(%arg0: i32) -> (i32, i32) {
    %c0_i32 = arith.constant 0 : i32
    %c0_i32_0 = arith.constant 0 : i32
    %c0_i32_1 = arith.constant 0 : i32
    return %c0_i32, %c0_i32_0 : i32, i32
  }
  func.func @transform_6(%arg0: i32) -> (i32, i32) {
    %c0_i32 = arith.constant 0 : i32
    %c0_i32_0 = arith.constant 0 : i32
    %c0_i32_1 = arith.constant 0 : i32
    return %c0_i32, %c0_i32_0 : i32, i32
  }
  func.func @transform_7(%arg0: i32) -> (i32, i32) {
    %c0_i32 = arith.constant 0 : i32
    %c0_i32_0 = arith.constant 0 : i32
    %c0_i32_1 = arith.constant 0 : i32
    return %c0_i32, %c0_i32_0 : i32, i32
  }
  func.func @transform_8(%arg0: i32) -> (i32, i32) {
    %c0_i32 = arith.constant 0 : i32
    %c0_i32_0 = arith.constant 0 : i32
    %c0_i32_1 = arith.constant 0 : i32
    return %c0_i32, %c0_i32_0 : i32, i32
  }
  func.func @transform_9(%arg0: i32) -> (i32, i32) {
    %c0_i32 = arith.constant 0 : i32
    %c0_i32_0 = arith.constant 0 : i32
    %c0_i32_1 = arith.constant 0 : i32
    return %c0_i32, %c0_i32_0 : i32, i32
  }
  func.func @transform_10(%arg0: i32) -> (i32, i32) {
    %c0_i32 = arith.constant 0 : i32
    %c0_i32_0 = arith.constant 0 : i32
    %c0_i32_1 = arith.constant 0 : i32
    return %c0_i32, %c0_i32_0 : i32, i32
  }
  func.func @transform_11(%arg0: i32) -> (i32, i32) {
    %c0_i32 = arith.constant 0 : i32
    %c0_i32_0 = arith.constant 0 : i32
    %c0_i32_1 = arith.constant 0 : i32
    return %c0_i32, %c0_i32_0 : i32, i32
  }
  func.func @transform_12(%arg0: i32) -> (i32, i32) {
    %c0_i32 = arith.constant 0 : i32
    %c0_i32_0 = arith.constant 0 : i32
    %c0_i32_1 = arith.constant 0 : i32
    return %c0_i32, %c0_i32_0 : i32, i32
  }
  func.func @transform_13(%arg0: i32) -> (i32, i32) {
    %c0_i32 = arith.constant 0 : i32
    %c0_i32_0 = arith.constant 0 : i32
    %c0_i32_1 = arith.constant 0 : i32
    return %c0_i32, %c0_i32_0 : i32, i32
  }
  func.func @transform_14(%arg0: i32) -> (i32, i32) {
    %c0_i32 = arith.constant 0 : i32
    %c0_i32_0 = arith.constant 0 : i32
    %c0_i32_1 = arith.constant 0 : i32
    return %c0_i32, %c0_i32_0 : i32, i32
  }
  func.func @transform_15(%arg0: i32) -> (i32, i32) {
    %c0_i32 = arith.constant 0 : i32
    %c0_i32_0 = arith.constant 0 : i32
    %c0_i32_1 = arith.constant 0 : i32
    return %c0_i32, %c0_i32_0 : i32, i32
  }
  func.func @transform_16(%arg0: i32) -> (i32, i32) {
    %c0_i32 = arith.constant 0 : i32
    %c0_i32_0 = arith.constant 0 : i32
    %c0_i32_1 = arith.constant 0 : i32
    return %c0_i32, %c0_i32_0 : i32, i32
  }
  func.func @transform_17(%arg0: i32) -> (i32, i32) {
    %c0_i32 = arith.constant 0 : i32
    %c0_i32_0 = arith.constant 0 : i32
    %c0_i32_1 = arith.constant 0 : i32
    return %c0_i32, %c0_i32_0 : i32, i32
  }
  func.func @transform_18(%arg0: i32) -> (i32, i32) {
    %c0_i32 = arith.constant 0 : i32
    %c0_i32_0 = arith.constant 0 : i32
    %c0_i32_1 = arith.constant 0 : i32
    return %c0_i32, %c0_i32_0 : i32, i32
  }
  func.func @transform_19(%arg0: i32) -> (i32, i32) {
    %c0_i32 = arith.constant 0 : i32
    %c0_i32_0 = arith.constant 0 : i32
    %c0_i32_1 = arith.constant 0 : i32
    return %c0_i32, %c0_i32_0 : i32, i32
  }
  func.func @transform_20(%arg0: i32) -> (i32, i32) {
    %c0_i32 = arith.constant 0 : i32
    %c0_i32_0 = arith.constant 0 : i32
    %c0_i32_1 = arith.constant 0 : i32
    return %c0_i32, %c0_i32_0 : i32, i32
  }
  func.func @transform_21(%arg0: i32) -> (i32, i32) {
    %c0_i32 = arith.constant 0 : i32
    %c0_i32_0 = arith.constant 0 : i32
    %c0_i32_1 = arith.constant 0 : i32
    return %c0_i32, %c0_i32_0 : i32, i32
  }
  func.func @transform_22(%arg0: i32) -> (i32, i32) {
    %c0_i32 = arith.constant 0 : i32
    %c0_i32_0 = arith.constant 0 : i32
    %c0_i32_1 = arith.constant 0 : i32
    return %c0_i32, %c0_i32_0 : i32, i32
  }
  func.func @transform_23(%arg0: i32) -> (i32, i32) {
    %c0_i32 = arith.constant 0 : i32
    %c0_i32_0 = arith.constant 0 : i32
    %c0_i32_1 = arith.constant 0 : i32
    return %c0_i32, %c0_i32_0 : i32, i32
  }
  func.func @transform_24(%arg0: i32) -> (i32, i32) {
    %c0_i32 = arith.constant 0 : i32
    %c0_i32_0 = arith.constant 0 : i32
    %c0_i32_1 = arith.constant 0 : i32
    return %c0_i32, %c0_i32_0 : i32, i32
  }
  func.func @transform_25(%arg0: i32) -> (i32, i32) {
    %c0_i32 = arith.constant 0 : i32
    %c0_i32_0 = arith.constant 0 : i32
    %c0_i32_1 = arith.constant 0 : i32
    return %c0_i32, %c0_i32_0 : i32, i32
  }
  func.func @transform_26(%arg0: i32) -> (i32, i32) {
    %c0_i32 = arith.constant 0 : i32
    %c0_i32_0 = arith.constant 0 : i32
    %c0_i32_1 = arith.constant 0 : i32
    return %c0_i32, %c0_i32_0 : i32, i32
  }
  func.func @transform_27(%arg0: i32) -> (i32, i32) {
    %c0_i32 = arith.constant 0 : i32
    %c0_i32_0 = arith.constant 0 : i32
    %c0_i32_1 = arith.constant 0 : i32
    return %c0_i32, %c0_i32_0 : i32, i32
  }
  func.func @transform_28(%arg0: i32) -> (i32, i32) {
    %c0_i32 = arith.constant 0 : i32
    %c0_i32_0 = arith.constant 0 : i32
    %c0_i32_1 = arith.constant 0 : i32
    return %c0_i32, %c0_i32_0 : i32, i32
  }
  func.func @transform_29(%arg0: i32) -> (i32, i32, i32) {
    %c0_i32 = arith.constant 0 : i32
    %c0_i32_0 = arith.constant 0 : i32
    %c0_i32_1 = arith.constant 0 : i32
    return %c0_i32, %arg0, %c0_i32_0 : i32, i32, i32
  }
}

</mosaic_0001>

<llo_original>
// kernel: tpu_custom_call.1
$region0: #{tpu_custom_call.1}
  #allocation0 [shape = 'u32[]', space=smem, size = 0x4, offset = 0x4, fixed_abs, tag = 'smem constant byte address 0x4 - core index']
  #allocation1 [shape = 'u32[144,128]{1,0:T(1,128)}', space=vmem, size = 0x12000, scoped, tag = 'internal scratch']
  %s0 = inlined_call_operand.smem [shape: u32[30], index: -1, kind: input, shape index: {}]
  %s1 = sld [smem:[%s0]]
  %s2 = scalar_lea.smem %s0, 1
  %s3 = sld [smem:[%s2]]
  %s4 = scalar_lea.smem %s0, 2
  %s5 = sld [smem:[%s4]]
  %s6 = scalar_lea.smem %s0, 3
  %s7 = sld [smem:[%s6]]
  %s8 = scalar_lea.smem %s0, 4
  %s9 = sld [smem:[%s8]]
  %s10 = scalar_lea.smem %s0, 5
  %s11 = sld [smem:[%s10]]
  %s12 = scalar_lea.smem %s0, 6
  %s13 = sld [smem:[%s12]]
  %s14 = scalar_lea.smem %s0, 7
  %s15 = sld [smem:[%s14]]
  %s16 = scalar_lea.smem %s0, 8
  %s17 = sld [smem:[%s16]]
  %s18 = scalar_lea.smem %s0, 9
  %s19 = sld [smem:[%s18]]
  %s20 = scalar_lea.smem %s0, 10
  %s21 = sld [smem:[%s20]]
  %s22 = scalar_lea.smem %s0, 11
  %s23 = sld [smem:[%s22]]
  %s24 = scalar_lea.smem %s0, 12
  %s25 = sld [smem:[%s24]]
  %s26 = scalar_lea.smem %s0, 13
  %s27 = sld [smem:[%s26]]
  %s28 = scalar_lea.smem %s0, 14
  %s29 = sld [smem:[%s28]]
  %s30 = scalar_lea.smem %s0, 15
  %s31 = sld [smem:[%s30]]
  %s32 = scalar_lea.smem %s0, 16
  %s33 = sld [smem:[%s32]]
  %s34 = scalar_lea.smem %s0, 17
  %s35 = sld [smem:[%s34]]
  %s36 = scalar_lea.smem %s0, 18
  %s37 = sld [smem:[%s36]]
  %s38 = scalar_lea.smem %s0, 19
  %s39 = sld [smem:[%s38]]
  %s40 = scalar_lea.smem %s0, 20
  %s41 = sld [smem:[%s40]]
  %s42 = scalar_lea.smem %s0, 21
  %s43 = sld [smem:[%s42]]
  %s44 = scalar_lea.smem %s0, 22
  %s45 = sld [smem:[%s44]]
  %s46 = scalar_lea.smem %s0, 23
  %s47 = sld [smem:[%s46]]
  %s48 = scalar_lea.smem %s0, 24
  %s49 = sld [smem:[%s48]]
  %s50 = scalar_lea.smem %s0, 25
  %s51 = sld [smem:[%s50]]
  %s52 = scalar_lea.smem %s0, 26
  %s53 = sld [smem:[%s52]]
  %s54 = scalar_lea.smem %s0, 27
  %s55 = sld [smem:[%s54]]
  %s56 = scalar_lea.smem %s0, 28
  %s57 = sld [smem:[%s56]]
  %s58 = scalar_lea.smem %s0, 29
  %s59 = sld [smem:[%s58]]
  %s60 = sld [smem:[#allocation0]]
  $region194: #{tpu_custom_call.1} parent=0
    _
  %s62 = ssub.s32 1, %s60
  %s63 = scalar_select 0, %s62, %s60
  $region1: #{tpu_custom_call.1} parent=0
    #allocation2 [shape = 'u8[4096]{0}', space=vmem, size = 0x1000, scoped, tag = 'input window, operand 0, single buffered']
    #allocation3 [shape = 's32[1]{0}', space=sflag, size = 0x4, scoped, tag = 'scoped memory for tpu_custom_call.1']
    #allocation4 [shape = 's32[1]{0}', space=sflag, size = 0x4, scoped, tag = 'scoped memory for tpu_custom_call.1']
    #allocation5 [shape = 'u8[65536]{0}', space=vmem, size = 0x10000, scoped, tag = 'input window, operand 1, single buffered']
    #allocation6 [shape = 's32[1]{0}', space=sflag, size = 0x4, scoped, tag = 'scoped memory for tpu_custom_call.1']
    #allocation7 [shape = 'u8[65536]{0}', space=vmem, size = 0x10000, scoped, tag = 'input window, operand 3, single buffered']
    #allocation8 [shape = 'u8[65536]{0}', space=vmem, size = 0x10000, scoped, tag = 'input window, operand 5, single buffered']
    #allocation9 [shape = 's32[1]{0}', space=sflag, size = 0x4, scoped, tag = 'scoped memory for tpu_custom_call.1']
    #allocation10 [shape = 'u8[65536]{0}', space=vmem, size = 0x10000, scoped, tag = 'input window, operand 7, single buffered']
    #allocation11 [shape = 'u8[65536]{0}', space=vmem, size = 0x10000, scoped, tag = 'input window, operand 9, single buffered']
    #allocation12 [shape = 's32[1]{0}', space=sflag, size = 0x4, scoped, tag = 'scoped memory for tpu_custom_call.1']
    #allocation13 [shape = 'u8[65536]{0}', space=vmem, size = 0x10000, scoped, tag = 'input window, operand 10, single buffered']
    #allocation14 [shape = 'u8[65536]{0}', space=vmem, size = 0x10000, scoped, tag = 'input window, operand 12, single buffered']
    #allocation15 [shape = 's32[1]{0}', space=sflag, size = 0x4, scoped, tag = 'scoped memory for tpu_custom_call.1']
    #allocation16 [shape = 'u8[65536]{0}', space=vmem, size = 0x10000, scoped, tag = 'input window, operand 13, single buffered']
    #allocation17 [shape = 'u8[65536]{0}', space=vmem, size = 0x10000, scoped, tag = 'input window, operand 15, single buffered']
    #allocation18 [shape = 's32[1]{0}', space=sflag, size = 0x4, scoped, tag = 'scoped memory for tpu_custom_call.1']
    #allocation19 [shape = 'u8[65536]{0}', space=vmem, size = 0x10000, scoped, tag = 'input window, operand 17, single buffered']
    #allocation20 [shape = 'u8[65536]{0}', space=vmem, size = 0x10000, scoped, tag = 'input window, operand 19, single buffered']
    #allocation21 [shape = 's32[1]{0}', space=sflag, size = 0x4, scoped, tag = 'scoped memory for tpu_custom_call.1']
    #allocation22 [shape = 'u8[65536]{0}', space=vmem, size = 0x10000, scoped, tag = 'input window, operand 21, single buffered']
    #allocation23 [shape = 'u8[65536]{0}', space=vmem, size = 0x10000, scoped, tag = 'input window, operand 23, single buffered']
    #allocation24 [shape = 's32[1]{0}', space=sflag, size = 0x4, scoped, tag = 'scoped memory for tpu_custom_call.1']
    #allocation25 [shape = 'u8[65536]{0}', space=vmem, size = 0x10000, scoped, tag = 'input window, operand 24, single buffered']
    #allocation26 [shape = 'u8[65536]{0}', space=vmem, size = 0x10000, scoped, tag = 'input window, operand 26, single buffered']
    #allocation27 [shape = 's32[1]{0}', space=sflag, size = 0x4, scoped, tag = 'scoped memory for tpu_custom_call.1']
    #allocation28 [shape = 'u8[65536]{0}', space=vmem, size = 0x10000, scoped, tag = 'input window, operand 27, single buffered']
    #allocation29 [shape = 'u8[8192]{0}', space=vmem, size = 0x2000, scoped, tag = 'output window, operand 0, single buffered']
    %64 = vsyncpa [#allocation3], 0
    %65 = vsyncpa [#allocation6], 0
    %66 = vsyncpa [#allocation9], 0
    %67 = vsyncpa [#allocation12], 0
    %68 = vsyncpa [#allocation15], 0
    %69 = vsyncpa [#allocation18], 0
    %70 = vsyncpa [#allocation21], 0
    %71 = vsyncpa [#allocation24], 0
    %72 = vsyncpa [#allocation27], 0
    %73 = vsyncpa [#allocation4], 0
    // Predicated region
    $region2: #{tpu_custom_call.1} parent=1 // pred_check
      _
    $region3: #{tpu_custom_call.1} parent=1 // pred_check_branch
      %75 = sbr.rel (0) target = $region5
    $region4: #{tpu_custom_call.1} parent=1 // pred_region
      %s77 = ssub.s32 128, 128
      %78 = vsyncadd [#allocation3], %s77
      %s80 = sshll.u32 [#allocation2], 4
      %s81 = int_to_ptr.vmem [resolvable:$true] %s80
      %83 = dma.hbm_to_vmem [thread:$0]  %s1, 128, %s81, [#allocation3]
    $region5: #{tpu_custom_call.1} parent=1 // pred_fallthru
      _
    // Predicated region
    $region6: #{tpu_custom_call.1} parent=1 // pred_check
      _
    $region7: #{tpu_custom_call.1} parent=1 // pred_check_branch
      %85 = sbr.rel (0) target = $region9
    $region8: #{tpu_custom_call.1} parent=1 // pred_region
      %s87 = ssub.s32 2048, 2048
      %88 = vsyncadd [#allocation6], %s87
      %s89 = sshll.u32 [#allocation5], 4
      %s90 = int_to_ptr.vmem [resolvable:$true] %s89
      %95 = dma.hbm_to_vmem [thread:$0]  %s3, 2048, %s90, [#allocation6], 128, 128, 8
    $region9: #{tpu_custom_call.1} parent=1 // pred_fallthru
      _
    // Predicated region
    $region10: #{tpu_custom_call.1} parent=1 // pred_check
      _
    $region11: #{tpu_custom_call.1} parent=1 // pred_check_branch
      %97 = sbr.rel (0) target = $region13
    $region12: #{tpu_custom_call.1} parent=1 // pred_region
      _
    $region13: #{tpu_custom_call.1} parent=1 // pred_fallthru
      _
    // Predicated region
    $region14: #{tpu_custom_call.1} parent=1 // pred_check
      _
    $region15: #{tpu_custom_call.1} parent=1 // pred_check_branch
      %99 = sbr.rel (0) target = $region17
    $region16: #{tpu_custom_call.1} parent=1 // pred_region
      %s101 = ssub.s32 2048, 2048
      %102 = vsyncadd [#allocation6], %s101
      %s103 = sshll.u32 [#allocation7], 4
      %s104 = int_to_ptr.vmem [resolvable:$true] %s103
      %109 = dma.hbm_to_vmem [thread:$0]  %s7, 2048, %s104, [#allocation6], 128, 128, 8
    $region17: #{tpu_custom_call.1} parent=1 // pred_fallthru
      _
    // Predicated region
    $region18: #{tpu_custom_call.1} parent=1 // pred_check
      _
    $region19: #{tpu_custom_call.1} parent=1 // pred_check_branch
      %111 = sbr.rel (0) target = $region21
    $region20: #{tpu_custom_call.1} parent=1 // pred_region
      _
    $region21: #{tpu_custom_call.1} parent=1 // pred_fallthru
      _
    // Predicated region
    $region22: #{tpu_custom_call.1} parent=1 // pred_check
      _
    $region23: #{tpu_custom_call.1} parent=1 // pred_check_branch
      %113 = sbr.rel (0) target = $region25
    $region24: #{tpu_custom_call.1} parent=1 // pred_region
      %s115 = ssub.s32 2048, 2048
      %116 = vsyncadd [#allocation9], %s115
      %s117 = sshll.u32 [#allocation8], 4
      %s118 = int_to_ptr.vmem [resolvable:$true] %s117
      %123 = dma.hbm_to_vmem [thread:$0]  %s11, 2048, %s118, [#allocation9], 128, 128, 8
    $region25: #{tpu_custom_call.1} parent=1 // pred_fallthru
      _
    // Predicated region
    $region26: #{tpu_custom_call.1} parent=1 // pred_check
      _
    $region27: #{tpu_custom_call.1} parent=1 // pred_check_branch
      %125 = sbr.rel (0) target = $region29
    $region28: #{tpu_custom_call.1} parent=1 // pred_region
      _
    $region29: #{tpu_custom_call.1} parent=1 // pred_fallthru
      _
    // Predicated region
    $region30: #{tpu_custom_call.1} parent=1 // pred_check
      _
    $region31: #{tpu_custom_call.1} parent=1 // pred_check_branch
      %127 = sbr.rel (0) target = $region33
    $region32: #{tpu_custom_call.1} parent=1 // pred_region
      %s129 = ssub.s32 2048, 2048
      %130 = vsyncadd [#allocation9], %s129
      %s131 = sshll.u32 [#allocation10], 4
      %s132 = int_to_ptr.vmem [resolvable:$true] %s131
      %137 = dma.hbm_to_vmem [thread:$0]  %s15, 2048, %s132, [#allocation9], 128, 128, 8
    $region33: #{tpu_custom_call.1} parent=1 // pred_fallthru
      _
    // Predicated region
    $region34: #{tpu_custom_call.1} parent=1 // pred_check
      _
    $region35: #{tpu_custom_call.1} parent=1 // pred_check_branch
      %139 = sbr.rel (0) target = $region37
    $region36: #{tpu_custom_call.1} parent=1 // pred_region
      _
    $region37: #{tpu_custom_call.1} parent=1 // pred_fallthru
      _
    // Predicated region
    $region38: #{tpu_custom_call.1} parent=1 // pred_check
      _
    $region39: #{tpu_custom_call.1} parent=1 // pred_check_branch
      %141 = sbr.rel (0) target = $region41
    $region40: #{tpu_custom_call.1} parent=1 // pred_region
      %s143 = ssub.s32 2048, 2048
      %144 = vsyncadd [#allocation12], %s143
      %s145 = sshll.u32 [#allocation11], 4
      %s146 = int_to_ptr.vmem [resolvable:$true] %s145
      %151 = dma.hbm_to_vmem [thread:$0]  %s19, 2048, %s146, [#allocation12], 128, 128, 8
    $region41: #{tpu_custom_call.1} parent=1 // pred_fallthru
      _
    // Predicated region
    $region42: #{tpu_custom_call.1} parent=1 // pred_check
      _
    $region43: #{tpu_custom_call.1} parent=1 // pred_check_branch
      %153 = sbr.rel (0) target = $region45
    $region44: #{tpu_custom_call.1} parent=1 // pred_region
      %s155 = ssub.s32 2048, 2048
      %156 = vsyncadd [#allocation12], %s155
      %s157 = sshll.u32 [#allocation13], 4
      %s158 = int_to_ptr.vmem [resolvable:$true] %s157
      %163 = dma.hbm_to_vmem [thread:$0]  %s21, 2048, %s158, [#allocation12], 128, 128, 8
    $region45: #{tpu_custom_call.1} parent=1 // pred_fallthru
      _
    // Predicated region
    $region46: #{tpu_custom_call.1} parent=1 // pred_check
      _
    $region47: #{tpu_custom_call.1} parent=1 // pred_check_branch
      %165 = sbr.rel (0) target = $region49
    $region48: #{tpu_custom_call.1} parent=1 // pred_region
      _
    $region49: #{tpu_custom_call.1} parent=1 // pred_fallthru
      _
    // Predicated region
    $region50: #{tpu_custom_call.1} parent=1 // pred_check
      _
    $region51: #{tpu_custom_call.1} parent=1 // pred_check_branch
      %167 = sbr.rel (0) target = $region53
    $region52: #{tpu_custom_call.1} parent=1 // pred_region
      %s169 = ssub.s32 2048, 2048
      %170 = vsyncadd [#allocation15], %s169
      %s171 = sshll.u32 [#allocation14], 4
      %s172 = int_to_ptr.vmem [resolvable:$true] %s171
      %177 = dma.hbm_to_vmem [thread:$0]  %s25, 2048, %s172, [#allocation15], 128, 128, 8
    $region53: #{tpu_custom_call.1} parent=1 // pred_fallthru
      _
    // Predicated region
    $region54: #{tpu_custom_call.1} parent=1 // pred_check
      _
    $region55: #{tpu_custom_call.1} parent=1 // pred_check_branch
      %179 = sbr.rel (0) target = $region57
    $region56: #{tpu_custom_call.1} parent=1 // pred_region
      %s181 = ssub.s32 2048, 2048
      %182 = vsyncadd [#allocation15], %s181
      %s183 = sshll.u32 [#allocation16], 4
      %s184 = int_to_ptr.vmem [resolvable:$true] %s183
      %189 = dma.hbm_to_vmem [thread:$0]  %s27, 2048, %s184, [#allocation15], 128, 128, 8
    $region57: #{tpu_custom_call.1} parent=1 // pred_fallthru
      _
    // Predicated region
    $region58: #{tpu_custom_call.1} parent=1 // pred_check
      _
    $region59: #{tpu_custom_call.1} parent=1 // pred_check_branch
      %191 = sbr.rel (0) target = $region61
    $region60: #{tpu_custom_call.1} parent=1 // pred_region
      _
    $region61: #{tpu_custom_call.1} parent=1 // pred_fallthru
      _
    // Predicated region
    $region62: #{tpu_custom_call.1} parent=1 // pred_check
      _
    $region63: #{tpu_custom_call.1} parent=1 // pred_check_branch
      %193 = sbr.rel (0) target = $region65
    $region64: #{tpu_custom_call.1} parent=1 // pred_region
      %s195 = ssub.s32 2048, 2048
      %196 = vsyncadd [#allocation18], %s195
      %s197 = sshll.u32 [#allocation17], 4
      %s198 = int_to_ptr.vmem [resolvable:$true] %s197
      %203 = dma.hbm_to_vmem [thread:$0]  %s31, 2048, %s198, [#allocation18], 128, 128, 8
    $region65: #{tpu_custom_call.1} parent=1 // pred_fallthru
      _
    // Predicated region
    $region66: #{tpu_custom_call.1} parent=1 // pred_check
      _
    $region67: #{tpu_custom_call.1} parent=1 // pred_check_branch
      %205 = sbr.rel (0) target = $region69
    $region68: #{tpu_custom_call.1} parent=1 // pred_region
      _
    $region69: #{tpu_custom_call.1} parent=1 // pred_fallthru
      _
    // Predicated region
    $region70: #{tpu_custom_call.1} parent=1 // pred_check
      _
    $region71: #{tpu_custom_call.1} parent=1 // pred_check_branch
      %207 = sbr.rel (0) target = $region73
    $region72: #{tpu_custom_call.1} parent=1 // pred_region
      %s209 = ssub.s32 2048, 2048
      %210 = vsyncadd [#allocation18], %s209
      %s211 = sshll.u32 [#allocation19], 4
      %s212 = int_to_ptr.vmem [resolvable:$true] %s211
      %217 = dma.hbm_to_vmem [thread:$0]  %s35, 2048, %s212, [#allocation18], 128, 128, 8
    $region73: #{tpu_custom_call.1} parent=1 // pred_fallthru
      _
    // Predicated region
    $region74: #{tpu_custom_call.1} parent=1 // pred_check
      _
    $region75: #{tpu_custom_call.1} parent=1 // pred_check_branch
      %219 = sbr.rel (0) target = $region77
    $region76: #{tpu_custom_call.1} parent=1 // pred_region
      _
    $region77: #{tpu_custom_call.1} parent=1 // pred_fallthru
      _
    // Predicated region
    $region78: #{tpu_custom_call.1} parent=1 // pred_check
      _
    $region79: #{tpu_custom_call.1} parent=1 // pred_check_branch
      %221 = sbr.rel (0) target = $region81
    $region80: #{tpu_custom_call.1} parent=1 // pred_region
      %s223 = ssub.s32 2048, 2048
      %224 = vsyncadd [#allocation21], %s223
      %s225 = sshll.u32 [#allocation20], 4
      %s226 = int_to_ptr.vmem [resolvable:$true] %s225
      %231 = dma.hbm_to_vmem [thread:$0]  %s39, 2048, %s226, [#allocation21], 128, 128, 8
    $region81: #{tpu_custom_call.1} parent=1 // pred_fallthru
      _
    // Predicated region
    $region82: #{tpu_custom_call.1} parent=1 // pred_check
      _
    $region83: #{tpu_custom_call.1} parent=1 // pred_check_branch
      %233 = sbr.rel (0) target = $region85
    $region84: #{tpu_custom_call.1} parent=1 // pred_region
      _
    $region85: #{tpu_custom_call.1} parent=1 // pred_fallthru
      _
    // Predicated region
    $region86: #{tpu_custom_call.1} parent=1 // pred_check
      _
    $region87: #{tpu_custom_call.1} parent=1 // pred_check_branch
      %235 = sbr.rel (0) target = $region89
    $region88: #{tpu_custom_call.1} parent=1 // pred_region
      %s237 = ssub.s32 2048, 2048
      %238 = vsyncadd [#allocation21], %s237
      %s239 = sshll.u32 [#allocation22], 4
      %s240 = int_to_ptr.vmem [resolvable:$true] %s239
      %245 = dma.hbm_to_vmem [thread:$0]  %s43, 2048, %s240, [#allocation21], 128, 128, 8
    $region89: #{tpu_custom_call.1} parent=1 // pred_fallthru
      _
    // Predicated region
    $region90: #{tpu_custom_call.1} parent=1 // pred_check
      _
    $region91: #{tpu_custom_call.1} parent=1 // pred_check_branch
      %247 = sbr.rel (0) target = $region93
    $region92: #{tpu_custom_call.1} parent=1 // pred_region
      _
    $region93: #{tpu_custom_call.1} parent=1 // pred_fallthru
      _
    // Predicated region
    $region94: #{tpu_custom_call.1} parent=1 // pred_check
      _
    $region95: #{tpu_custom_call.1} parent=1 // pred_check_branch
      %249 = sbr.rel (0) target = $region97
    $region96: #{tpu_custom_call.1} parent=1 // pred_region
      %s251 = ssub.s32 2048, 2048
      %252 = vsyncadd [#allocation24], %s251
      %s253 = sshll.u32 [#allocation23], 4
      %s254 = int_to_ptr.vmem [resolvable:$true] %s253
      %259 = dma.hbm_to_vmem [thread:$0]  %s47, 2048, %s254, [#allocation24], 128, 128, 8
    $region97: #{tpu_custom_call.1} parent=1 // pred_fallthru
      _
    // Predicated region
    $region98: #{tpu_custom_call.1} parent=1 // pred_check
      _
    $region99: #{tpu_custom_call.1} parent=1 // pred_check_branch
      %261 = sbr.rel (0) target = $region101
    $region100: #{tpu_custom_call.1} parent=1 // pred_region
      %s263 = ssub.s32 2048, 2048
      %264 = vsyncadd [#allocation24], %s263
      %s265 = sshll.u32 [#allocation25], 4
      %s266 = int_to_ptr.vmem [resolvable:$true] %s265
      %271 = dma.hbm_to_vmem [thread:$0]  %s49, 2048, %s266, [#allocation24], 128, 128, 8
    $region101: #{tpu_custom_call.1} parent=1 // pred_fallthru
      _
    // Predicated region
    $region102: #{tpu_custom_call.1} parent=1 // pred_check
      _
    $region103: #{tpu_custom_call.1} parent=1 // pred_check_branch
      %273 = sbr.rel (0) target = $region105
    $region104: #{tpu_custom_call.1} parent=1 // pred_region
      _
    $region105: #{tpu_custom_call.1} parent=1 // pred_fallthru
      _
    // Predicated region
    $region106: #{tpu_custom_call.1} parent=1 // pred_check
      _
    $region107: #{tpu_custom_call.1} parent=1 // pred_check_branch
      %275 = sbr.rel (0) target = $region109
    $region108: #{tpu_custom_call.1} parent=1 // pred_region
      %s277 = ssub.s32 2048, 2048
      %278 = vsyncadd [#allocation27], %s277
      %s279 = sshll.u32 [#allocation26], 4
      %s280 = int_to_ptr.vmem [resolvable:$true] %s279
      %285 = dma.hbm_to_vmem [thread:$0]  %s53, 2048, %s280, [#allocation27], 128, 128, 8
    $region109: #{tpu_custom_call.1} parent=1 // pred_fallthru
      _
    // Predicated region
    $region110: #{tpu_custom_call.1} parent=1 // pred_check
      _
    $region111: #{tpu_custom_call.1} parent=1 // pred_check_branch
      %287 = sbr.rel (0) target = $region113
    $region112: #{tpu_custom_call.1} parent=1 // pred_region
      %s289 = ssub.s32 2048, 2048
      %290 = vsyncadd [#allocation27], %s289
      %s291 = sshll.u32 [#allocation28], 4
      %s292 = int_to_ptr.vmem [resolvable:$true] %s291
      %297 = dma.hbm_to_vmem [thread:$0]  %s55, 2048, %s292, [#allocation27], 128, 128, 8
    $region113: #{tpu_custom_call.1} parent=1 // pred_fallthru
      _
    // Predicated region
    $region114: #{tpu_custom_call.1} parent=1 // pred_check
      _
    $region115: #{tpu_custom_call.1} parent=1 // pred_check_branch
      %299 = sbr.rel (0) target = $region117
    $region116: #{tpu_custom_call.1} parent=1 // pred_region
      _
    $region117: #{tpu_custom_call.1} parent=1 // pred_fallthru
      _
    // Predicated region
    $region118: #{tpu_custom_call.1} parent=1 // pred_check
      _
    $region119: #{tpu_custom_call.1} parent=1 // pred_check_branch
      %301 = sbr.rel (0) target = $region121
    $region120: #{tpu_custom_call.1} parent=1 // pred_region
      %302 = dma.done [#allocation3], 128
    $region121: #{tpu_custom_call.1} parent=1 // pred_fallthru
      _
    // Predicated region
    $region122: #{tpu_custom_call.1} parent=1 // pred_check
      _
    $region123: #{tpu_custom_call.1} parent=1 // pred_check_branch
      %304 = sbr.rel (0) target = $region125
    $region124: #{tpu_custom_call.1} parent=1 // pred_region
      %305 = dma.done [#allocation6], 2048
    $region125: #{tpu_custom_call.1} parent=1 // pred_fallthru
      _
    // Predicated region
    $region126: #{tpu_custom_call.1} parent=1 // pred_check
      _
    $region127: #{tpu_custom_call.1} parent=1 // pred_check_branch
      %307 = sbr.rel (0) target = $region129
    $region128: #{tpu_custom_call.1} parent=1 // pred_region
      %308 = dma.done [#allocation6], 2048
    $region129: #{tpu_custom_call.1} parent=1 // pred_fallthru
      _
    // Predicated region
    $region130: #{tpu_custom_call.1} parent=1 // pred_check
      _
    $region131: #{tpu_custom_call.1} parent=1 // pred_check_branch
      %310 = sbr.rel (0) target = $region133
    $region132: #{tpu_custom_call.1} parent=1 // pred_region
      %311 = dma.done [#allocation9], 2048
    $region133: #{tpu_custom_call.1} parent=1 // pred_fallthru
      _
    // Predicated region
    $region134: #{tpu_custom_call.1} parent=1 // pred_check
      _
    $region135: #{tpu_custom_call.1} parent=1 // pred_check_branch
      %313 = sbr.rel (0) target = $region137
    $region136: #{tpu_custom_call.1} parent=1 // pred_region
      %314 = dma.done [#allocation9], 2048
    $region137: #{tpu_custom_call.1} parent=1 // pred_fallthru
      _
    // Predicated region
    $region138: #{tpu_custom_call.1} parent=1 // pred_check
      _
    $region139: #{tpu_custom_call.1} parent=1 // pred_check_branch
      %316 = sbr.rel (0) target = $region141
    $region140: #{tpu_custom_call.1} parent=1 // pred_region
      %317 = dma.done [#allocation12], 2048
    $region141: #{tpu_custom_call.1} parent=1 // pred_fallthru
      _
    // Predicated region
    $region142: #{tpu_custom_call.1} parent=1 // pred_check
      _
    $region143: #{tpu_custom_call.1} parent=1 // pred_check_branch
      %319 = sbr.rel (0) target = $region145
    $region144: #{tpu_custom_call.1} parent=1 // pred_region
      %320 = dma.done [#allocation12], 2048
    $region145: #{tpu_custom_call.1} parent=1 // pred_fallthru
      _
    // Predicated region
    $region146: #{tpu_custom_call.1} parent=1 // pred_check
      _
    $region147: #{tpu_custom_call.1} parent=1 // pred_check_branch
      %322 = sbr.rel (0) target = $region149
    $region148: #{tpu_custom_call.1} parent=1 // pred_region
      %323 = dma.done [#allocation15], 2048
    $region149: #{tpu_custom_call.1} parent=1 // pred_fallthru
      _
    // Predicated region
    $region150: #{tpu_custom_call.1} parent=1 // pred_check
      _
    $region151: #{tpu_custom_call.1} parent=1 // pred_check_branch
      %325 = sbr.rel (0) target = $region153
    $region152: #{tpu_custom_call.1} parent=1 // pred_region
      %326 = dma.done [#allocation15], 2048
    $region153: #{tpu_custom_call.1} parent=1 // pred_fallthru
      _
    // Predicated region
    $region154: #{tpu_custom_call.1} parent=1 // pred_check
      _
    $region155: #{tpu_custom_call.1} parent=1 // pred_check_branch
      %328 = sbr.rel (0) target = $region157
    $region156: #{tpu_custom_call.1} parent=1 // pred_region
      %329 = dma.done [#allocation18], 2048
    $region157: #{tpu_custom_call.1} parent=1 // pred_fallthru
      _
    // Predicated region
    $region158: #{tpu_custom_call.1} parent=1 // pred_check
      _
    $region159: #{tpu_custom_call.1} parent=1 // pred_check_branch
      %331 = sbr.rel (0) target = $region161
    $region160: #{tpu_custom_call.1} parent=1 // pred_region
      %332 = dma.done [#allocation18], 2048
    $region161: #{tpu_custom_call.1} parent=1 // pred_fallthru
      _
    // Predicated region
    $region162: #{tpu_custom_call.1} parent=1 // pred_check
      _
    $region163: #{tpu_custom_call.1} parent=1 // pred_check_branch
      %334 = sbr.rel (0) target = $region165
    $region164: #{tpu_custom_call.1} parent=1 // pred_region
      %335 = dma.done [#allocation21], 2048
    $region165: #{tpu_custom_call.1} parent=1 // pred_fallthru
      _
    // Predicated region
    $region166: #{tpu_custom_call.1} parent=1 // pred_check
      _
    $region167: #{tpu_custom_call.1} parent=1 // pred_check_branch
      %337 = sbr.rel (0) target = $region169
    $region168: #{tpu_custom_call.1} parent=1 // pred_region
      %338 = dma.done [#allocation21], 2048
    $region169: #{tpu_custom_call.1} parent=1 // pred_fallthru
      _
    // Predicated region
    $region170: #{tpu_custom_call.1} parent=1 // pred_check
      _
    $region171: #{tpu_custom_call.1} parent=1 // pred_check_branch
      %340 = sbr.rel (0) target = $region173
    $region172: #{tpu_custom_call.1} parent=1 // pred_region
      %341 = dma.done [#allocation24], 2048
    $region173: #{tpu_custom_call.1} parent=1 // pred_fallthru
      _
    // Predicated region
    $region174: #{tpu_custom_call.1} parent=1 // pred_check
      _
    $region175: #{tpu_custom_call.1} parent=1 // pred_check_branch
      %343 = sbr.rel (0) target = $region177
    $region176: #{tpu_custom_call.1} parent=1 // pred_region
      %344 = dma.done [#allocation24], 2048
    $region177: #{tpu_custom_call.1} parent=1 // pred_fallthru
      _
    // Predicated region
    $region178: #{tpu_custom_call.1} parent=1 // pred_check
      _
    $region179: #{tpu_custom_call.1} parent=1 // pred_check_branch
      %346 = sbr.rel (0) target = $region181
    $region180: #{tpu_custom_call.1} parent=1 // pred_region
      %347 = dma.done [#allocation27], 2048
    $region181: #{tpu_custom_call.1} parent=1 // pred_fallthru
      _
    // Predicated region
    $region182: #{tpu_custom_call.1} parent=1 // pred_check
      _
    $region183: #{tpu_custom_call.1} parent=1 // pred_check_branch
      %349 = sbr.rel (0) target = $region185
    $region184: #{tpu_custom_call.1} parent=1 // pred_region
      %350 = dma.done [#allocation27], 2048
    $region185: #{tpu_custom_call.1} parent=1 // pred_fallthru
      _
    %v351 = vld [vmem:[#allocation2] sm:$0xff]
    %v352 = vld [vmem:[#allocation5] sm:$0xff]
    %v353 = vld [vmem:[#allocation5 + $0x8] sm:$0xff]
    %v354 = vld [vmem:[#allocation5 + $0x10] sm:$0xff]
    %v355 = vld [vmem:[#allocation5 + $0x18] sm:$0xff]
    %v356 = vld [vmem:[#allocation5 + $0x20] sm:$0xff]
    %v357 = vld [vmem:[#allocation5 + $0x28] sm:$0xff]
    %v358 = vld [vmem:[#allocation5 + $0x30] sm:$0xff]
    %v359 = vld [vmem:[#allocation5 + $0x38] sm:$0xff]
    %v360 = vld [vmem:[#allocation5 + $0x40] sm:$0xff]
    %v361 = vld [vmem:[#allocation5 + $0x48] sm:$0xff]
    %v362 = vld [vmem:[#allocation5 + $0x50] sm:$0xff]
    %v363 = vld [vmem:[#allocation5 + $0x58] sm:$0xff]
    %v364 = vld [vmem:[#allocation5 + $0x60] sm:$0xff]
    %v365 = vld [vmem:[#allocation5 + $0x68] sm:$0xff]
    %v366 = vld [vmem:[#allocation5 + $0x70] sm:$0xff]
    %v367 = vld [vmem:[#allocation5 + $0x78] sm:$0xff]
    %v368 = vld [vmem:[%s5] sm:$0x1]
    %v370 = vlaneseq
    %v371 = vshrl.u32 %v370, 7
    %v372 = vsub.s32 0, %v371
    %v373 = vrot.slane %v368, %v372
    %375 = vmatprep.subr.mxu0 0.0
    %376 = vmatpush1.msra.mxu0 %v367
    %377 = vmatprep.subr.mxu0 0.0
    %378 = vmatpush1.msra.mxu0 %v366
    %379 = vmatprep.subr.mxu0 0.0
    %380 = vmatpush1.msra.mxu0 %v365
    %381 = vmatprep.subr.mxu0 0.0
    %382 = vmatpush1.msra.mxu0 %v364
    %383 = vmatprep.subr.mxu0 0.0
    %384 = vmatpush1.msra.mxu0 %v363
    %385 = vmatprep.subr.mxu0 0.0
    %386 = vmatpush1.msra.mxu0 %v362
    %387 = vmatprep.subr.mxu0 0.0
    %388 = vmatpush1.msra.mxu0 %v361
    %389 = vmatprep.subr.mxu0 0.0
    %390 = vmatpush1.msra.mxu0 %v360
    %391 = vmatprep.subr.mxu0 0.0
    %392 = vmatpush1.msra.mxu0 %v359
    %393 = vmatprep.subr.mxu0 0.0
    %394 = vmatpush1.msra.mxu0 %v358
    %395 = vmatprep.subr.mxu0 0.0
    %396 = vmatpush1.msra.mxu0 %v357
    %397 = vmatprep.subr.mxu0 0.0
    %398 = vmatpush1.msra.mxu0 %v356
    %399 = vmatprep.subr.mxu0 0.0
    %400 = vmatpush1.msra.mxu0 %v355
    %401 = vmatprep.subr.mxu0 0.0
    %402 = vmatpush1.msra.mxu0 %v354
    %403 = vmatprep.subr.mxu0 0.0
    %404 = vmatpush1.msra.mxu0 %v353
    %405 = vmatprep.subr.mxu0 0.0
    %406 = vmatpush1.msra.mxu0 %v352
    %407 = vmatprep.subr.mxu0 0.0
    %408 = vmatpush2.msra.mxu0 0.0
    %409 = vmatprep.subr.mxu0 0.0
    %410 = vmatpush2.msra.mxu0 0.0
    %411 = vmatprep.subr.mxu0 0.0
    %412 = vmatpush2.msra.mxu0 0.0
    %413 = vmatprep.subr.mxu0 0.0
    %414 = vmatpush2.msra.mxu0 0.0
    %415 = vmatprep.subr.mxu0 0.0
    %416 = vmatpush2.msra.mxu0 0.0
    %417 = vmatprep.subr.mxu0 0.0
    %418 = vmatpush2.msra.mxu0 0.0
    %419 = vmatprep.subr.mxu0 0.0
    %420 = vmatpush2.msra.mxu0 0.0
    %421 = vmatprep.subr.mxu0 0.0
    %422 = vmatpush2.msra.mxu0 0.0
    %423 = vmatprep.subr.mxu0 0.0
    %424 = vmatpush2.msra.mxu0 0.0
    %425 = vmatprep.subr.mxu0 0.0
    %426 = vmatpush2.msra.mxu0 0.0
    %427 = vmatprep.subr.mxu0 0.0
    %428 = vmatpush2.msra.mxu0 0.0
    %429 = vmatprep.subr.mxu0 0.0
    %430 = vmatpush2.msra.mxu0 0.0
    %431 = vmatprep.subr.mxu0 0.0
    %432 = vmatpush2.msra.mxu0 0.0
    %433 = vmatprep.subr.mxu0 0.0
    %434 = vmatpush2.msra.mxu0 0.0
    %435 = vmatprep.subr.mxu0 0.0
    %436 = vmatpush2.msra.mxu0 0.0
    %437 = vmatprep.subr.mxu0 0.0
    %438 = vmatpush2.msra.mxu0 0.0
    %439 = vmatprep.mubr.f32.mxu0 0.0
    %440 = vmatmul.mubr.f32.gmra.mxu0 %v351
    %v441 = vpop.f32.mrf.mxu0
    %v442 = vadd.f32 %v373, %v441
    %v443 = vpop.f32.mrf.mxu0
    %444 = vdwg.mxu0
    %vm445 = vcmp.gt.f32.partialorder %v442, 0.0
    %v446 = vmul.f32 %v442, 0.01
    %v447 = vsel %vm445, %v442, %v446
    %v448 = vld [vmem:[#allocation7] sm:$0xff]
    %v449 = vld [vmem:[#allocation7 + $0x8] sm:$0xff]
    %v450 = vld [vmem:[#allocation7 + $0x10] sm:$0xff]
    %v451 = vld [vmem:[#allocation7 + $0x18] sm:$0xff]
    %v452 = vld [vmem:[#allocation7 + $0x20] sm:$0xff]
    %v453 = vld [vmem:[#allocation7 + $0x28] sm:$0xff]
    %v454 = vld [vmem:[#allocation7 + $0x30] sm:$0xff]
    %v455 = vld [vmem:[#allocation7 + $0x38] sm:$0xff]
    %v456 = vld [vmem:[#allocation7 + $0x40] sm:$0xff]
    %v457 = vld [vmem:[#allocation7 + $0x48] sm:$0xff]
    %v458 = vld [vmem:[#allocation7 + $0x50] sm:$0xff]
    %v459 = vld [vmem:[#allocation7 + $0x58] sm:$0xff]
    %v460 = vld [vmem:[#allocation7 + $0x60] sm:$0xff]
    %v461 = vld [vmem:[#allocation7 + $0x68] sm:$0xff]
    %v462 = vld [vmem:[#allocation7 + $0x70] sm:$0xff]
    %v463 = vld [vmem:[#allocation7 + $0x78] sm:$0xff]
    %v464 = vld [vmem:[%s9] sm:$0x1]
    %v466 = vlaneseq
    %v467 = vshrl.u32 %v466, 7
    %v468 = vsub.s32 0, %v467
    %v469 = vrot.slane %v464, %v468
    %471 = vmatprep.subr.mxu0 0.0
    %472 = vmatpush1.msra.mxu0 %v463
    %473 = vmatprep.subr.mxu0 0.0
    %474 = vmatpush1.msra.mxu0 %v462
    %475 = vmatprep.subr.mxu0 0.0
    %476 = vmatpush1.msra.mxu0 %v461
    %477 = vmatprep.subr.mxu0 0.0
    %478 = vmatpush1.msra.mxu0 %v460
    %479 = vmatprep.subr.mxu0 0.0
    %480 = vmatpush1.msra.mxu0 %v459
    %481 = vmatprep.subr.mxu0 0.0
    %482 = vmatpush1.msra.mxu0 %v458
    %483 = vmatprep.subr.mxu0 0.0
    %484 = vmatpush1.msra.mxu0 %v457
    %485 = vmatprep.subr.mxu0 0.0
    %486 = vmatpush1.msra.mxu0 %v456
    %487 = vmatprep.subr.mxu0 0.0
    %488 = vmatpush1.msra.mxu0 %v455
    %489 = vmatprep.subr.mxu0 0.0
    %490 = vmatpush1.msra.mxu0 %v454
    %491 = vmatprep.subr.mxu0 0.0
    %492 = vmatpush1.msra.mxu0 %v453
    %493 = vmatprep.subr.mxu0 0.0
    %494 = vmatpush1.msra.mxu0 %v452
    %495 = vmatprep.subr.mxu0 0.0
    %496 = vmatpush1.msra.mxu0 %v451
    %497 = vmatprep.subr.mxu0 0.0
    %498 = vmatpush1.msra.mxu0 %v450
    %499 = vmatprep.subr.mxu0 0.0
    %500 = vmatpush1.msra.mxu0 %v449
    %501 = vmatprep.subr.mxu0 0.0
    %502 = vmatpush1.msra.mxu0 %v448
    %503 = vmatprep.subr.mxu0 0.0
    %504 = vmatpush2.msra.mxu0 0.0
    %505 = vmatprep.subr.mxu0 0.0
    %506 = vmatpush2.msra.mxu0 0.0
    %507 = vmatprep.subr.mxu0 0.0
    %508 = vmatpush2.msra.mxu0 0.0
    %509 = vmatprep.subr.mxu0 0.0
    %510 = vmatpush2.msra.mxu0 0.0
    %511 = vmatprep.subr.mxu0 0.0
    %512 = vmatpush2.msra.mxu0 0.0
    %513 = vmatprep.subr.mxu0 0.0
    %514 = vmatpush2.msra.mxu0 0.0
    %515 = vmatprep.subr.mxu0 0.0
    %516 = vmatpush2.msra.mxu0 0.0
    %517 = vmatprep.subr.mxu0 0.0
    %518 = vmatpush2.msra.mxu0 0.0
    %519 = vmatprep.subr.mxu0 0.0
    %520 = vmatpush2.msra.mxu0 0.0
    %521 = vmatprep.subr.mxu0 0.0
    %522 = vmatpush2.msra.mxu0 0.0
    %523 = vmatprep.subr.mxu0 0.0
    %524 = vmatpush2.msra.mxu0 0.0
    %525 = vmatprep.subr.mxu0 0.0
    %526 = vmatpush2.msra.mxu0 0.0
    %527 = vmatprep.subr.mxu0 0.0
    %528 = vmatpush2.msra.mxu0 0.0
    %529 = vmatprep.subr.mxu0 0.0
    %530 = vmatpush2.msra.mxu0 0.0
    %531 = vmatprep.subr.mxu0 0.0
    %532 = vmatpush2.msra.mxu0 0.0
    %533 = vmatprep.subr.mxu0 0.0
    %534 = vmatpush2.msra.mxu0 0.0
    %535 = vmatprep.mubr.f32.mxu0 0.0
    %536 = vmatmul.mubr.f32.gmra.mxu0 %v447
    %v537 = vpop.f32.mrf.mxu0
    %v538 = vadd.f32 %v469, %v537
    %v539 = vpop.f32.mrf.mxu0
    %540 = vdwg.mxu0
    %vm541 = vcmp.gt.f32.partialorder %v538, 0.0
    %v542 = vmul.f32 %v538, 0.01
    %v543 = vsel %vm541, %v538, %v542
    %v544 = vld [vmem:[#allocation8] sm:$0xff]
    %v545 = vld [vmem:[#allocation8 + $0x8] sm:$0xff]
    %v546 = vld [vmem:[#allocation8 + $0x10] sm:$0xff]
    %v547 = vld [vmem:[#allocation8 + $0x18] sm:$0xff]
    %v548 = vld [vmem:[#allocation8 + $0x20] sm:$0xff]
    %v549 = vld [vmem:[#allocation8 + $0x28] sm:$0xff]
    %v550 = vld [vmem:[#allocation8 + $0x30] sm:$0xff]
    %v551 = vld [vmem:[#allocation8 + $0x38] sm:$0xff]
    %v552 = vld [vmem:[#allocation8 + $0x40] sm:$0xff]
    %v553 = vld [vmem:[#allocation8 + $0x48] sm:$0xff]
    %v554 = vld [vmem:[#allocation8 + $0x50] sm:$0xff]
    %v555 = vld [vmem:[#allocation8 + $0x58] sm:$0xff]
    %v556 = vld [vmem:[#allocation8 + $0x60] sm:$0xff]
    %v557 = vld [vmem:[#allocation8 + $0x68] sm:$0xff]
    %v558 = vld [vmem:[#allocation8 + $0x70] sm:$0xff]
    %v559 = vld [vmem:[#allocation8 + $0x78] sm:$0xff]
    %v560 = vld [vmem:[%s13] sm:$0x1]
    %v562 = vlaneseq
    %v563 = vshrl.u32 %v562, 7
    %v564 = vsub.s32 0, %v563
    %v565 = vrot.slane %v560, %v564
    %567 = vmatprep.subr.mxu0 0.0
    %568 = vmatpush1.msra.mxu0 %v559
    %569 = vmatprep.subr.mxu0 0.0
    %570 = vmatpush1.msra.mxu0 %v558
    %571 = vmatprep.subr.mxu0 0.0
    %572 = vmatpush1.msra.mxu0 %v557
    %573 = vmatprep.subr.mxu0 0.0
    %574 = vmatpush1.msra.mxu0 %v556
    %575 = vmatprep.subr.mxu0 0.0
    %576 = vmatpush1.msra.mxu0 %v555
    %577 = vmatprep.subr.mxu0 0.0
    %578 = vmatpush1.msra.mxu0 %v554
    %579 = vmatprep.subr.mxu0 0.0
    %580 = vmatpush1.msra.mxu0 %v553
    %581 = vmatprep.subr.mxu0 0.0
    %582 = vmatpush1.msra.mxu0 %v552
    %583 = vmatprep.subr.mxu0 0.0
    %584 = vmatpush1.msra.mxu0 %v551
    %585 = vmatprep.subr.mxu0 0.0
    %586 = vmatpush1.msra.mxu0 %v550
    %587 = vmatprep.subr.mxu0 0.0
    %588 = vmatpush1.msra.mxu0 %v549
    %589 = vmatprep.subr.mxu0 0.0
    %590 = vmatpush1.msra.mxu0 %v548
    %591 = vmatprep.subr.mxu0 0.0
    %592 = vmatpush1.msra.mxu0 %v547
    %593 = vmatprep.subr.mxu0 0.0
    %594 = vmatpush1.msra.mxu0 %v546
    %595 = vmatprep.subr.mxu0 0.0
    %596 = vmatpush1.msra.mxu0 %v545
    %597 = vmatprep.subr.mxu0 0.0
    %598 = vmatpush1.msra.mxu0 %v544
    %599 = vmatprep.subr.mxu0 0.0
    %600 = vmatpush2.msra.mxu0 0.0
    %601 = vmatprep.subr.mxu0 0.0
    %602 = vmatpush2.msra.mxu0 0.0
    %603 = vmatprep.subr.mxu0 0.0
    %604 = vmatpush2.msra.mxu0 0.0
    %605 = vmatprep.subr.mxu0 0.0
    %606 = vmatpush2.msra.mxu0 0.0
    %607 = vmatprep.subr.mxu0 0.0
    %608 = vmatpush2.msra.mxu0 0.0
    %609 = vmatprep.subr.mxu0 0.0
    %610 = vmatpush2.msra.mxu0 0.0
    %611 = vmatprep.subr.mxu0 0.0
    %612 = vmatpush2.msra.mxu0 0.0
    %613 = vmatprep.subr.mxu0 0.0
    %614 = vmatpush2.msra.mxu0 0.0
    %615 = vmatprep.subr.mxu0 0.0
    %616 = vmatpush2.msra.mxu0 0.0
    %617 = vmatprep.subr.mxu0 0.0
    %618 = vmatpush2.msra.mxu0 0.0
    %619 = vmatprep.subr.mxu0 0.0
    %620 = vmatpush2.msra.mxu0 0.0
    %621 = vmatprep.subr.mxu0 0.0
    %622 = vmatpush2.msra.mxu0 0.0
    %623 = vmatprep.subr.mxu0 0.0
    %624 = vmatpush2.msra.mxu0 0.0
    %625 = vmatprep.subr.mxu0 0.0
    %626 = vmatpush2.msra.mxu0 0.0
    %627 = vmatprep.subr.mxu0 0.0
    %628 = vmatpush2.msra.mxu0 0.0
    %629 = vmatprep.subr.mxu0 0.0
    %630 = vmatpush2.msra.mxu0 0.0
    %631 = vmatprep.mubr.f32.mxu0 0.0
    %632 = vmatmul.mubr.f32.gmra.mxu0 %v543
    %v633 = vpop.f32.mrf.mxu0
    %v634 = vadd.f32 %v565, %v633
    %v635 = vpop.f32.mrf.mxu0
    %636 = vdwg.mxu0
    %vm637 = vcmp.gt.f32.partialorder %v634, 0.0
    %v638 = vmul.f32 %v634, 0.01
    %v639 = vsel %vm637, %v634, %v638
    %v640 = vld [vmem:[#allocation10] sm:$0xff]
    %v641 = vld [vmem:[#allocation10 + $0x8] sm:$0xff]
    %v642 = vld [vmem:[#allocation10 + $0x10] sm:$0xff]
    %v643 = vld [vmem:[#allocation10 + $0x18] sm:$0xff]
    %v644 = vld [vmem:[#allocation10 + $0x20] sm:$0xff]
    %v645 = vld [vmem:[#allocation10 + $0x28] sm:$0xff]
    %v646 = vld [vmem:[#allocation10 + $0x30] sm:$0xff]
    %v647 = vld [vmem:[#allocation10 + $0x38] sm:$0xff]
    %v648 = vld [vmem:[#allocation10 + $0x40] sm:$0xff]
    %v649 = vld [vmem:[#allocation10 + $0x48] sm:$0xff]
    %v650 = vld [vmem:[#allocation10 + $0x50] sm:$0xff]
    %v651 = vld [vmem:[#allocation10 + $0x58] sm:$0xff]
    %v652 = vld [vmem:[#allocation10 + $0x60] sm:$0xff]
    %v653 = vld [vmem:[#allocation10 + $0x68] sm:$0xff]
    %v654 = vld [vmem:[#allocation10 + $0x70] sm:$0xff]
    %v655 = vld [vmem:[#allocation10 + $0x78] sm:$0xff]
    %v656 = vld [vmem:[%s17] sm:$0x1]
    %v658 = vlaneseq
    %v659 = vshrl.u32 %v658, 7
    %v660 = vsub.s32 0, %v659
    %v661 = vrot.slane %v656, %v660
    %663 = vmatprep.subr.mxu0 0.0
    %664 = vmatpush1.msra.mxu0 %v655
    %665 = vmatprep.subr.mxu0 0.0
    %666 = vmatpush1.msra.mxu0 %v654
    %667 = vmatprep.subr.mxu0 0.0
    %668 = vmatpush1.msra.mxu0 %v653
    %669 = vmatprep.subr.mxu0 0.0
    %670 = vmatpush1.msra.mxu0 %v652
    %671 = vmatprep.subr.mxu0 0.0
    %672 = vmatpush1.msra.mxu0 %v651
    %673 = vmatprep.subr.mxu0 0.0
    %674 = vmatpush1.msra.mxu0 %v650
    %675 = vmatprep.subr.mxu0 0.0
    %676 = vmatpush1.msra.mxu0 %v649
    %677 = vmatprep.subr.mxu0 0.0
    %678 = vmatpush1.msra.mxu0 %v648
    %679 = vmatprep.subr.mxu0 0.0
    %680 = vmatpush1.msra.mxu0 %v647
    %681 = vmatprep.subr.mxu0 0.0
    %682 = vmatpush1.msra.mxu0 %v646
    %683 = vmatprep.subr.mxu0 0.0
    %684 = vmatpush1.msra.mxu0 %v645
    %685 = vmatprep.subr.mxu0 0.0
    %686 = vmatpush1.msra.mxu0 %v644
    %687 = vmatprep.subr.mxu0 0.0
    %688 = vmatpush1.msra.mxu0 %v643
    %689 = vmatprep.subr.mxu0 0.0
    %690 = vmatpush1.msra.mxu0 %v642
    %691 = vmatprep.subr.mxu0 0.0
    %692 = vmatpush1.msra.mxu0 %v641
    %693 = vmatprep.subr.mxu0 0.0
    %694 = vmatpush1.msra.mxu0 %v640
    %695 = vmatprep.subr.mxu0 0.0
    %696 = vmatpush2.msra.mxu0 0.0
    %697 = vmatprep.subr.mxu0 0.0
    %698 = vmatpush2.msra.mxu0 0.0
    %699 = vmatprep.subr.mxu0 0.0
    %700 = vmatpush2.msra.mxu0 0.0
    %701 = vmatprep.subr.mxu0 0.0
    %702 = vmatpush2.msra.mxu0 0.0
    %703 = vmatprep.subr.mxu0 0.0
    %704 = vmatpush2.msra.mxu0 0.0
    %705 = vmatprep.subr.mxu0 0.0
    %706 = vmatpush2.msra.mxu0 0.0
    %707 = vmatprep.subr.mxu0 0.0
    %708 = vmatpush2.msra.mxu0 0.0
    %709 = vmatprep.subr.mxu0 0.0
    %710 = vmatpush2.msra.mxu0 0.0
    %711 = vmatprep.subr.mxu0 0.0
    %712 = vmatpush2.msra.mxu0 0.0
    %713 = vmatprep.subr.mxu0 0.0
    %714 = vmatpush2.msra.mxu0 0.0
    %715 = vmatprep.subr.mxu0 0.0
    %716 = vmatpush2.msra.mxu0 0.0
    %717 = vmatprep.subr.mxu0 0.0
    %718 = vmatpush2.msra.mxu0 0.0
    %719 = vmatprep.subr.mxu0 0.0
    %720 = vmatpush2.msra.mxu0 0.0
    %721 = vmatprep.subr.mxu0 0.0
    %722 = vmatpush2.msra.mxu0 0.0
    %723 = vmatprep.subr.mxu0 0.0
    %724 = vmatpush2.msra.mxu0 0.0
    %725 = vmatprep.subr.mxu0 0.0
    %726 = vmatpush2.msra.mxu0 0.0
    %727 = vmatprep.mubr.f32.mxu0 0.0
    %728 = vmatmul.mubr.f32.gmra.mxu0 %v639
    %v729 = vpop.f32.mrf.mxu0
    %v730 = vadd.f32 %v661, %v729
    %v731 = vpop.f32.mrf.mxu0
    %732 = vdwg.mxu0
    %v733 = vld [vmem:[#allocation11] sm:$0xff]
    %v734 = vld [vmem:[#allocation11 + $0x8] sm:$0xff]
    %v735 = vld [vmem:[#allocation11 + $0x10] sm:$0xff]
    %v736 = vld [vmem:[#allocation11 + $0x18] sm:$0xff]
    %v737 = vld [vmem:[#allocation11 + $0x20] sm:$0xff]
    %v738 = vld [vmem:[#allocation11 + $0x28] sm:$0xff]
    %v739 = vld [vmem:[#allocation11 + $0x30] sm:$0xff]
    %v740 = vld [vmem:[#allocation11 + $0x38] sm:$0xff]
    %v741 = vld [vmem:[#allocation11 + $0x40] sm:$0xff]
    %v742 = vld [vmem:[#allocation11 + $0x48] sm:$0xff]
    %v743 = vld [vmem:[#allocation11 + $0x50] sm:$0xff]
    %v744 = vld [vmem:[#allocation11 + $0x58] sm:$0xff]
    %v745 = vld [vmem:[#allocation11 + $0x60] sm:$0xff]
    %v746 = vld [vmem:[#allocation11 + $0x68] sm:$0xff]
    %v747 = vld [vmem:[#allocation11 + $0x70] sm:$0xff]
    %v748 = vld [vmem:[#allocation11 + $0x78] sm:$0xff]
    %v749 = vld [vmem:[#allocation13] sm:$0xff]
    %v750 = vld [vmem:[#allocation13 + $0x8] sm:$0xff]
    %v751 = vld [vmem:[#allocation13 + $0x10] sm:$0xff]
    %v752 = vld [vmem:[#allocation13 + $0x18] sm:$0xff]
    %v753 = vld [vmem:[#allocation13 + $0x20] sm:$0xff]
    %v754 = vld [vmem:[#allocation13 + $0x28] sm:$0xff]
    %v755 = vld [vmem:[#allocation13 + $0x30] sm:$0xff]
    %v756 = vld [vmem:[#allocation13 + $0x38] sm:$0xff]
    %v757 = vld [vmem:[#allocation13 + $0x40] sm:$0xff]
    %v758 = vld [vmem:[#allocation13 + $0x48] sm:$0xff]
    %v759 = vld [vmem:[#allocation13 + $0x50] sm:$0xff]
    %v760 = vld [vmem:[#allocation13 + $0x58] sm:$0xff]
    %v761 = vld [vmem:[#allocation13 + $0x60] sm:$0xff]
    %v762 = vld [vmem:[#allocation13 + $0x68] sm:$0xff]
    %v763 = vld [vmem:[#allocation13 + $0x70] sm:$0xff]
    %v764 = vld [vmem:[#allocation13 + $0x78] sm:$0xff]
    %765 = vmatprep.subr.mxu0 0.0
    %766 = vmatpush1.msra.mxu0 %v764
    %767 = vmatprep.subr.mxu0 0.0
    %768 = vmatpush1.msra.mxu0 %v763
    %769 = vmatprep.subr.mxu0 0.0
    %770 = vmatpush1.msra.mxu0 %v762
    %771 = vmatprep.subr.mxu0 0.0
    %772 = vmatpush1.msra.mxu0 %v761
    %773 = vmatprep.subr.mxu0 0.0
    %774 = vmatpush1.msra.mxu0 %v760
    %775 = vmatprep.subr.mxu0 0.0
    %776 = vmatpush1.msra.mxu0 %v759
    %777 = vmatprep.subr.mxu0 0.0
    %778 = vmatpush1.msra.mxu0 %v758
    %779 = vmatprep.subr.mxu0 0.0
    %780 = vmatpush1.msra.mxu0 %v757
    %781 = vmatprep.subr.mxu0 0.0
    %782 = vmatpush1.msra.mxu0 %v756
    %783 = vmatprep.subr.mxu0 0.0
    %784 = vmatpush1.msra.mxu0 %v755
    %785 = vmatprep.subr.mxu0 0.0
    %786 = vmatpush1.msra.mxu0 %v754
    %787 = vmatprep.subr.mxu0 0.0
    %788 = vmatpush1.msra.mxu0 %v753
    %789 = vmatprep.subr.mxu0 0.0
    %790 = vmatpush1.msra.mxu0 %v752
    %791 = vmatprep.subr.mxu0 0.0
    %792 = vmatpush1.msra.mxu0 %v751
    %793 = vmatprep.subr.mxu0 0.0
    %794 = vmatpush1.msra.mxu0 %v750
    %795 = vmatprep.subr.mxu0 0.0
    %796 = vmatpush1.msra.mxu0 %v749
    %797 = vmatprep.subr.mxu0 0.0
    %798 = vmatpush2.msra.mxu0 0.0
    %799 = vmatprep.subr.mxu0 0.0
    %800 = vmatpush2.msra.mxu0 0.0
    %801 = vmatprep.subr.mxu0 0.0
    %802 = vmatpush2.msra.mxu0 0.0
    %803 = vmatprep.subr.mxu0 0.0
    %804 = vmatpush2.msra.mxu0 0.0
    %805 = vmatprep.subr.mxu0 0.0
    %806 = vmatpush2.msra.mxu0 0.0
    %807 = vmatprep.subr.mxu0 0.0
    %808 = vmatpush2.msra.mxu0 0.0
    %809 = vmatprep.subr.mxu0 0.0
    %810 = vmatpush2.msra.mxu0 0.0
    %811 = vmatprep.subr.mxu0 0.0
    %812 = vmatpush2.msra.mxu0 0.0
    %813 = vmatprep.subr.mxu0 0.0
    %814 = vmatpush2.msra.mxu0 0.0
    %815 = vmatprep.subr.mxu0 0.0
    %816 = vmatpush2.msra.mxu0 0.0
    %817 = vmatprep.subr.mxu0 0.0
    %818 = vmatpush2.msra.mxu0 0.0
    %819 = vmatprep.subr.mxu0 0.0
    %820 = vmatpush2.msra.mxu0 0.0
    %821 = vmatprep.subr.mxu0 0.0
    %822 = vmatpush2.msra.mxu0 0.0
    %823 = vmatprep.subr.mxu0 0.0
    %824 = vmatpush2.msra.mxu0 0.0
    %825 = vmatprep.subr.mxu0 0.0
    %826 = vmatpush2.msra.mxu0 0.0
    %827 = vmatprep.subr.mxu0 0.0
    %828 = vmatpush2.msra.mxu0 0.0
    %829 = vmatprep.mubr.f32.mxu0 0.0
    %830 = vmatmul.mubr.f32.gmra.mxu0 %v543
    %v831 = vpop.f32.mrf.mxu0
    %v832 = vadd.f32 0.0, %v831
    %v833 = vpop.f32.mrf.mxu0
    %834 = vdwg.mxu0
    %835 = vmatprep.subr.mxu0 0.0
    %836 = vmatpush1.msra.mxu0 %v748
    %837 = vmatprep.subr.mxu0 0.0
    %838 = vmatpush1.msra.mxu0 %v747
    %839 = vmatprep.subr.mxu0 0.0
    %840 = vmatpush1.msra.mxu0 %v746
    %841 = vmatprep.subr.mxu0 0.0
    %842 = vmatpush1.msra.mxu0 %v745
    %843 = vmatprep.subr.mxu0 0.0
    %844 = vmatpush1.msra.mxu0 %v744
    %845 = vmatprep.subr.mxu0 0.0
    %846 = vmatpush1.msra.mxu0 %v743
    %847 = vmatprep.subr.mxu0 0.0
    %848 = vmatpush1.msra.mxu0 %v742
    %849 = vmatprep.subr.mxu0 0.0
    %850 = vmatpush1.msra.mxu0 %v741
    %851 = vmatprep.subr.mxu0 0.0
    %852 = vmatpush1.msra.mxu0 %v740
    %853 = vmatprep.subr.mxu0 0.0
    %854 = vmatpush1.msra.mxu0 %v739
    %855 = vmatprep.subr.mxu0 0.0
    %856 = vmatpush1.msra.mxu0 %v738
    %857 = vmatprep.subr.mxu0 0.0
    %858 = vmatpush1.msra.mxu0 %v737
    %859 = vmatprep.subr.mxu0 0.0
    %860 = vmatpush1.msra.mxu0 %v736
    %861 = vmatprep.subr.mxu0 0.0
    %862 = vmatpush1.msra.mxu0 %v735
    %863 = vmatprep.subr.mxu0 0.0
    %864 = vmatpush1.msra.mxu0 %v734
    %865 = vmatprep.subr.mxu0 0.0
    %866 = vmatpush1.msra.mxu0 %v733
    %867 = vmatprep.subr.mxu0 0.0
    %868 = vmatpush2.msra.mxu0 0.0
    %869 = vmatprep.subr.mxu0 0.0
    %870 = vmatpush2.msra.mxu0 0.0
    %871 = vmatprep.subr.mxu0 0.0
    %872 = vmatpush2.msra.mxu0 0.0
    %873 = vmatprep.subr.mxu0 0.0
    %874 = vmatpush2.msra.mxu0 0.0
    %875 = vmatprep.subr.mxu0 0.0
    %876 = vmatpush2.msra.mxu0 0.0
    %877 = vmatprep.subr.mxu0 0.0
    %878 = vmatpush2.msra.mxu0 0.0
    %879 = vmatprep.subr.mxu0 0.0
    %880 = vmatpush2.msra.mxu0 0.0
    %881 = vmatprep.subr.mxu0 0.0
    %882 = vmatpush2.msra.mxu0 0.0
    %883 = vmatprep.subr.mxu0 0.0
    %884 = vmatpush2.msra.mxu0 0.0
    %885 = vmatprep.subr.mxu0 0.0
    %886 = vmatpush2.msra.mxu0 0.0
    %887 = vmatprep.subr.mxu0 0.0
    %888 = vmatpush2.msra.mxu0 0.0
    %889 = vmatprep.subr.mxu0 0.0
    %890 = vmatpush2.msra.mxu0 0.0
    %891 = vmatprep.subr.mxu0 0.0
    %892 = vmatpush2.msra.mxu0 0.0
    %893 = vmatprep.subr.mxu0 0.0
    %894 = vmatpush2.msra.mxu0 0.0
    %895 = vmatprep.subr.mxu0 0.0
    %896 = vmatpush2.msra.mxu0 0.0
    %897 = vmatprep.subr.mxu0 0.0
    %898 = vmatpush2.msra.mxu0 0.0
    %899 = vmatprep.mubr.f32.mxu0 0.0
    %900 = vmatmul.mubr.f32.gmra.mxu0 %v730
    %v901 = vpop.f32.mrf.mxu0
    %v902 = vadd.f32 %v832, %v901
    %v903 = vpop.f32.mrf.mxu0
    %904 = vdwg.mxu0
    %v905 = vld [vmem:[%s23] sm:$0x1]
    %v907 = vlaneseq
    %v908 = vshrl.u32 %v907, 7
    %v909 = vsub.s32 0, %v908
    %v910 = vrot.slane %v905, %v909
    %v912 = vadd.f32 %v902, %v910
    %vm913 = vcmp.gt.f32.partialorder %v912, 0.0
    %v914 = vmul.f32 %v912, 0.01
    %v915 = vsel %vm913, %v912, %v914
    %v916 = vld [vmem:[#allocation14] sm:$0xff]
    %v917 = vld [vmem:[#allocation14 + $0x8] sm:$0xff]
    %v918 = vld [vmem:[#allocation14 + $0x10] sm:$0xff]
    %v919 = vld [vmem:[#allocation14 + $0x18] sm:$0xff]
    %v920 = vld [vmem:[#allocation14 + $0x20] sm:$0xff]
    %v921 = vld [vmem:[#allocation14 + $0x28] sm:$0xff]
    %v922 = vld [vmem:[#allocation14 + $0x30] sm:$0xff]
    %v923 = vld [vmem:[#allocation14 + $0x38] sm:$0xff]
    %v924 = vld [vmem:[#allocation14 + $0x40] sm:$0xff]
    %v925 = vld [vmem:[#allocation14 + $0x48] sm:$0xff]
    %v926 = vld [vmem:[#allocation14 + $0x50] sm:$0xff]
    %v927 = vld [vmem:[#allocation14 + $0x58] sm:$0xff]
    %v928 = vld [vmem:[#allocation14 + $0x60] sm:$0xff]
    %v929 = vld [vmem:[#allocation14 + $0x68] sm:$0xff]
    %v930 = vld [vmem:[#allocation14 + $0x70] sm:$0xff]
    %v931 = vld [vmem:[#allocation14 + $0x78] sm:$0xff]
    %v932 = vld [vmem:[#allocation16] sm:$0xff]
    %v933 = vld [vmem:[#allocation16 + $0x8] sm:$0xff]
    %v934 = vld [vmem:[#allocation16 + $0x10] sm:$0xff]
    %v935 = vld [vmem:[#allocation16 + $0x18] sm:$0xff]
    %v936 = vld [vmem:[#allocation16 + $0x20] sm:$0xff]
    %v937 = vld [vmem:[#allocation16 + $0x28] sm:$0xff]
    %v938 = vld [vmem:[#allocation16 + $0x30] sm:$0xff]
    %v939 = vld [vmem:[#allocation16 + $0x38] sm:$0xff]
    %v940 = vld [vmem:[#allocation16 + $0x40] sm:$0xff]
    %v941 = vld [vmem:[#allocation16 + $0x48] sm:$0xff]
    %v942 = vld [vmem:[#allocation16 + $0x50] sm:$0xff]
    %v943 = vld [vmem:[#allocation16 + $0x58] sm:$0xff]
    %v944 = vld [vmem:[#allocation16 + $0x60] sm:$0xff]
    %v945 = vld [vmem:[#allocation16 + $0x68] sm:$0xff]
    %v946 = vld [vmem:[#allocation16 + $0x70] sm:$0xff]
    %v947 = vld [vmem:[#allocation16 + $0x78] sm:$0xff]
    %948 = vmatprep.subr.mxu0 0.0
    %949 = vmatpush1.msra.mxu0 %v947
    %950 = vmatprep.subr.mxu0 0.0
    %951 = vmatpush1.msra.mxu0 %v946
    %952 = vmatprep.subr.mxu0 0.0
    %953 = vmatpush1.msra.mxu0 %v945
    %954 = vmatprep.subr.mxu0 0.0
    %955 = vmatpush1.msra.mxu0 %v944
    %956 = vmatprep.subr.mxu0 0.0
    %957 = vmatpush1.msra.mxu0 %v943
    %958 = vmatprep.subr.mxu0 0.0
    %959 = vmatpush1.msra.mxu0 %v942
    %960 = vmatprep.subr.mxu0 0.0
    %961 = vmatpush1.msra.mxu0 %v941
    %962 = vmatprep.subr.mxu0 0.0
    %963 = vmatpush1.msra.mxu0 %v940
    %964 = vmatprep.subr.mxu0 0.0
    %965 = vmatpush1.msra.mxu0 %v939
    %966 = vmatprep.subr.mxu0 0.0
    %967 = vmatpush1.msra.mxu0 %v938
    %968 = vmatprep.subr.mxu0 0.0
    %969 = vmatpush1.msra.mxu0 %v937
    %970 = vmatprep.subr.mxu0 0.0
    %971 = vmatpush1.msra.mxu0 %v936
    %972 = vmatprep.subr.mxu0 0.0
    %973 = vmatpush1.msra.mxu0 %v935
    %974 = vmatprep.subr.mxu0 0.0
    %975 = vmatpush1.msra.mxu0 %v934
    %976 = vmatprep.subr.mxu0 0.0
    %977 = vmatpush1.msra.mxu0 %v933
    %978 = vmatprep.subr.mxu0 0.0
    %979 = vmatpush1.msra.mxu0 %v932
    %980 = vmatprep.subr.mxu0 0.0
    %981 = vmatpush2.msra.mxu0 0.0
    %982 = vmatprep.subr.mxu0 0.0
    %983 = vmatpush2.msra.mxu0 0.0
    %984 = vmatprep.subr.mxu0 0.0
    %985 = vmatpush2.msra.mxu0 0.0
    %986 = vmatprep.subr.mxu0 0.0
    %987 = vmatpush2.msra.mxu0 0.0
    %988 = vmatprep.subr.mxu0 0.0
    %989 = vmatpush2.msra.mxu0 0.0
    %990 = vmatprep.subr.mxu0 0.0
    %991 = vmatpush2.msra.mxu0 0.0
    %992 = vmatprep.subr.mxu0 0.0
    %993 = vmatpush2.msra.mxu0 0.0
    %994 = vmatprep.subr.mxu0 0.0
    %995 = vmatpush2.msra.mxu0 0.0
    %996 = vmatprep.subr.mxu0 0.0
    %997 = vmatpush2.msra.mxu0 0.0
    %998 = vmatprep.subr.mxu0 0.0
    %999 = vmatpush2.msra.mxu0 0.0
    %1000 = vmatprep.subr.mxu0 0.0
    %1001 = vmatpush2.msra.mxu0 0.0
    %1002 = vmatprep.subr.mxu0 0.0
    %1003 = vmatpush2.msra.mxu0 0.0
    %1004 = vmatprep.subr.mxu0 0.0
    %1005 = vmatpush2.msra.mxu0 0.0
    %1006 = vmatprep.subr.mxu0 0.0
    %1007 = vmatpush2.msra.mxu0 0.0
    %1008 = vmatprep.subr.mxu0 0.0
    %1009 = vmatpush2.msra.mxu0 0.0
    %1010 = vmatprep.subr.mxu0 0.0
    %1011 = vmatpush2.msra.mxu0 0.0
    %1012 = vmatprep.mubr.f32.mxu0 0.0
    %1013 = vmatmul.mubr.f32.gmra.mxu0 %v447
    %v1014 = vpop.f32.mrf.mxu0
    %v1015 = vadd.f32 0.0, %v1014
    %v1016 = vpop.f32.mrf.mxu0
    %1017 = vdwg.mxu0
    %1018 = vmatprep.subr.mxu0 0.0
    %1019 = vmatpush1.msra.mxu0 %v931
    %1020 = vmatprep.subr.mxu0 0.0
    %1021 = vmatpush1.msra.mxu0 %v930
    %1022 = vmatprep.subr.mxu0 0.0
    %1023 = vmatpush1.msra.mxu0 %v929
    %1024 = vmatprep.subr.mxu0 0.0
    %1025 = vmatpush1.msra.mxu0 %v928
    %1026 = vmatprep.subr.mxu0 0.0
    %1027 = vmatpush1.msra.mxu0 %v927
    %1028 = vmatprep.subr.mxu0 0.0
    %1029 = vmatpush1.msra.mxu0 %v926
    %1030 = vmatprep.subr.mxu0 0.0
    %1031 = vmatpush1.msra.mxu0 %v925
    %1032 = vmatprep.subr.mxu0 0.0
    %1033 = vmatpush1.msra.mxu0 %v924
    %1034 = vmatprep.subr.mxu0 0.0
    %1035 = vmatpush1.msra.mxu0 %v923
    %1036 = vmatprep.subr.mxu0 0.0
    %1037 = vmatpush1.msra.mxu0 %v922
    %1038 = vmatprep.subr.mxu0 0.0
    %1039 = vmatpush1.msra.mxu0 %v921
    %1040 = vmatprep.subr.mxu0 0.0
    %1041 = vmatpush1.msra.mxu0 %v920
    %1042 = vmatprep.subr.mxu0 0.0
    %1043 = vmatpush1.msra.mxu0 %v919
    %1044 = vmatprep.subr.mxu0 0.0
    %1045 = vmatpush1.msra.mxu0 %v918
    %1046 = vmatprep.subr.mxu0 0.0
    %1047 = vmatpush1.msra.mxu0 %v917
    %1048 = vmatprep.subr.mxu0 0.0
    %1049 = vmatpush1.msra.mxu0 %v916
    %1050 = vmatprep.subr.mxu0 0.0
    %1051 = vmatpush2.msra.mxu0 0.0
    %1052 = vmatprep.subr.mxu0 0.0
    %1053 = vmatpush2.msra.mxu0 0.0
    %1054 = vmatprep.subr.mxu0 0.0
    %1055 = vmatpush2.msra.mxu0 0.0
    %1056 = vmatprep.subr.mxu0 0.0
    %1057 = vmatpush2.msra.mxu0 0.0
    %1058 = vmatprep.subr.mxu0 0.0
    %1059 = vmatpush2.msra.mxu0 0.0
    %1060 = vmatprep.subr.mxu0 0.0
    %1061 = vmatpush2.msra.mxu0 0.0
    %1062 = vmatprep.subr.mxu0 0.0
    %1063 = vmatpush2.msra.mxu0 0.0
    %1064 = vmatprep.subr.mxu0 0.0
    %1065 = vmatpush2.msra.mxu0 0.0
    %1066 = vmatprep.subr.mxu0 0.0
    %1067 = vmatpush2.msra.mxu0 0.0
    %1068 = vmatprep.subr.mxu0 0.0
    %1069 = vmatpush2.msra.mxu0 0.0
    %1070 = vmatprep.subr.mxu0 0.0
    %1071 = vmatpush2.msra.mxu0 0.0
    %1072 = vmatprep.subr.mxu0 0.0
    %1073 = vmatpush2.msra.mxu0 0.0
    %1074 = vmatprep.subr.mxu0 0.0
    %1075 = vmatpush2.msra.mxu0 0.0
    %1076 = vmatprep.subr.mxu0 0.0
    %1077 = vmatpush2.msra.mxu0 0.0
    %1078 = vmatprep.subr.mxu0 0.0
    %1079 = vmatpush2.msra.mxu0 0.0
    %1080 = vmatprep.subr.mxu0 0.0
    %1081 = vmatpush2.msra.mxu0 0.0
    %1082 = vmatprep.mubr.f32.mxu0 0.0
    %1083 = vmatmul.mubr.f32.gmra.mxu0 %v915
    %v1084 = vpop.f32.mrf.mxu0
    %v1085 = vadd.f32 %v1015, %v1084
    %v1086 = vpop.f32.mrf.mxu0
    %1087 = vdwg.mxu0
    %v1088 = vld [vmem:[%s29] sm:$0x1]
    %v1090 = vlaneseq
    %v1091 = vshrl.u32 %v1090, 7
    %v1092 = vsub.s32 0, %v1091
    %v1093 = vrot.slane %v1088, %v1092
    %v1095 = vadd.f32 %v1085, %v1093
    %v1096 = vmax.f32 %v1095, 0.0
    %1097 = vst [vmem:[#allocation29] sm:$0xff] %v1096
    %v1098 = vadd.f32 %v351, %v1096
    %v1099 = vld [vmem:[#allocation17] sm:$0xff]
    %v1100 = vld [vmem:[#allocation17 + $0x8] sm:$0xff]
    %v1101 = vld [vmem:[#allocation17 + $0x10] sm:$0xff]
    %v1102 = vld [vmem:[#allocation17 + $0x18] sm:$0xff]
    %v1103 = vld [vmem:[#allocation17 + $0x20] sm:$0xff]
    %v1104 = vld [vmem:[#allocation17 + $0x28] sm:$0xff]
    %v1105 = vld [vmem:[#allocation17 + $0x30] sm:$0xff]
    %v1106 = vld [vmem:[#allocation17 + $0x38] sm:$0xff]
    %v1107 = vld [vmem:[#allocation17 + $0x40] sm:$0xff]
    %v1108 = vld [vmem:[#allocation17 + $0x48] sm:$0xff]
    %v1109 = vld [vmem:[#allocation17 + $0x50] sm:$0xff]
    %v1110 = vld [vmem:[#allocation17 + $0x58] sm:$0xff]
    %v1111 = vld [vmem:[#allocation17 + $0x60] sm:$0xff]
    %v1112 = vld [vmem:[#allocation17 + $0x68] sm:$0xff]
    %v1113 = vld [vmem:[#allocation17 + $0x70] sm:$0xff]
    %v1114 = vld [vmem:[#allocation17 + $0x78] sm:$0xff]
    %v1115 = vld [vmem:[%s33] sm:$0x1]
    %v1117 = vlaneseq
    %v1118 = vshrl.u32 %v1117, 7
    %v1119 = vsub.s32 0, %v1118
    %v1120 = vrot.slane %v1115, %v1119
    %1122 = vmatprep.subr.mxu0 0.0
    %1123 = vmatpush1.msra.mxu0 %v1114
    %1124 = vmatprep.subr.mxu0 0.0
    %1125 = vmatpush1.msra.mxu0 %v1113
    %1126 = vmatprep.subr.mxu0 0.0
    %1127 = vmatpush1.msra.mxu0 %v1112
    %1128 = vmatprep.subr.mxu0 0.0
    %1129 = vmatpush1.msra.mxu0 %v1111
    %1130 = vmatprep.subr.mxu0 0.0
    %1131 = vmatpush1.msra.mxu0 %v1110
    %1132 = vmatprep.subr.mxu0 0.0
    %1133 = vmatpush1.msra.mxu0 %v1109
    %1134 = vmatprep.subr.mxu0 0.0
    %1135 = vmatpush1.msra.mxu0 %v1108
    %1136 = vmatprep.subr.mxu0 0.0
    %1137 = vmatpush1.msra.mxu0 %v1107
    %1138 = vmatprep.subr.mxu0 0.0
    %1139 = vmatpush1.msra.mxu0 %v1106
    %1140 = vmatprep.subr.mxu0 0.0
    %1141 = vmatpush1.msra.mxu0 %v1105
    %1142 = vmatprep.subr.mxu0 0.0
    %1143 = vmatpush1.msra.mxu0 %v1104
    %1144 = vmatprep.subr.mxu0 0.0
    %1145 = vmatpush1.msra.mxu0 %v1103
    %1146 = vmatprep.subr.mxu0 0.0
    %1147 = vmatpush1.msra.mxu0 %v1102
    %1148 = vmatprep.subr.mxu0 0.0
    %1149 = vmatpush1.msra.mxu0 %v1101
    %1150 = vmatprep.subr.mxu0 0.0
    %1151 = vmatpush1.msra.mxu0 %v1100
    %1152 = vmatprep.subr.mxu0 0.0
    %1153 = vmatpush1.msra.mxu0 %v1099
    %1154 = vmatprep.subr.mxu0 0.0
    %1155 = vmatpush2.msra.mxu0 0.0
    %1156 = vmatprep.subr.mxu0 0.0
    %1157 = vmatpush2.msra.mxu0 0.0
    %1158 = vmatprep.subr.mxu0 0.0
    %1159 = vmatpush2.msra.mxu0 0.0
    %1160 = vmatprep.subr.mxu0 0.0
    %1161 = vmatpush2.msra.mxu0 0.0
    %1162 = vmatprep.subr.mxu0 0.0
    %1163 = vmatpush2.msra.mxu0 0.0
    %1164 = vmatprep.subr.mxu0 0.0
    %1165 = vmatpush2.msra.mxu0 0.0
    %1166 = vmatprep.subr.mxu0 0.0
    %1167 = vmatpush2.msra.mxu0 0.0
    %1168 = vmatprep.subr.mxu0 0.0
    %1169 = vmatpush2.msra.mxu0 0.0
    %1170 = vmatprep.subr.mxu0 0.0
    %1171 = vmatpush2.msra.mxu0 0.0
    %1172 = vmatprep.subr.mxu0 0.0
    %1173 = vmatpush2.msra.mxu0 0.0
    %1174 = vmatprep.subr.mxu0 0.0
    %1175 = vmatpush2.msra.mxu0 0.0
    %1176 = vmatprep.subr.mxu0 0.0
    %1177 = vmatpush2.msra.mxu0 0.0
    %1178 = vmatprep.subr.mxu0 0.0
    %1179 = vmatpush2.msra.mxu0 0.0
    %1180 = vmatprep.subr.mxu0 0.0
    %1181 = vmatpush2.msra.mxu0 0.0
    %1182 = vmatprep.subr.mxu0 0.0
    %1183 = vmatpush2.msra.mxu0 0.0
    %1184 = vmatprep.subr.mxu0 0.0
    %1185 = vmatpush2.msra.mxu0 0.0
    %1186 = vmatprep.mubr.f32.mxu0 0.0
    %1187 = vmatmul.mubr.f32.gmra.mxu0 %v1098
    %v1188 = vpop.f32.mrf.mxu0
    %v1189 = vadd.f32 %v1120, %v1188
    %v1190 = vpop.f32.mrf.mxu0
    %1191 = vdwg.mxu0
    %vm1192 = vcmp.gt.f32.partialorder %v1189, 0.0
    %v1193 = vmul.f32 %v1189, 0.01
    %v1194 = vsel %vm1192, %v1189, %v1193
    %v1195 = vld [vmem:[#allocation19] sm:$0xff]
    %v1196 = vld [vmem:[#allocation19 + $0x8] sm:$0xff]
    %v1197 = vld [vmem:[#allocation19 + $0x10] sm:$0xff]
    %v1198 = vld [vmem:[#allocation19 + $0x18] sm:$0xff]
    %v1199 = vld [vmem:[#allocation19 + $0x20] sm:$0xff]
    %v1200 = vld [vmem:[#allocation19 + $0x28] sm:$0xff]
    %v1201 = vld [vmem:[#allocation19 + $0x30] sm:$0xff]
    %v1202 = vld [vmem:[#allocation19 + $0x38] sm:$0xff]
    %v1203 = vld [vmem:[#allocation19 + $0x40] sm:$0xff]
    %v1204 = vld [vmem:[#allocation19 + $0x48] sm:$0xff]
    %v1205 = vld [vmem:[#allocation19 + $0x50] sm:$0xff]
    %v1206 = vld [vmem:[#allocation19 + $0x58] sm:$0xff]
    %v1207 = vld [vmem:[#allocation19 + $0x60] sm:$0xff]
    %v1208 = vld [vmem:[#allocation19 + $0x68] sm:$0xff]
    %v1209 = vld [vmem:[#allocation19 + $0x70] sm:$0xff]
    %v1210 = vld [vmem:[#allocation19 + $0x78] sm:$0xff]
    %v1211 = vld [vmem:[%s37] sm:$0x1]
    %v1213 = vlaneseq
    %v1214 = vshrl.u32 %v1213, 7
    %v1215 = vsub.s32 0, %v1214
    %v1216 = vrot.slane %v1211, %v1215
    %1218 = vmatprep.subr.mxu0 0.0
    %1219 = vmatpush1.msra.mxu0 %v1210
    %1220 = vmatprep.subr.mxu0 0.0
    %1221 = vmatpush1.msra.mxu0 %v1209
    %1222 = vmatprep.subr.mxu0 0.0
    %1223 = vmatpush1.msra.mxu0 %v1208
    %1224 = vmatprep.subr.mxu0 0.0
    %1225 = vmatpush1.msra.mxu0 %v1207
    %1226 = vmatprep.subr.mxu0 0.0
    %1227 = vmatpush1.msra.mxu0 %v1206
    %1228 = vmatprep.subr.mxu0 0.0
    %1229 = vmatpush1.msra.mxu0 %v1205
    %1230 = vmatprep.subr.mxu0 0.0
    %1231 = vmatpush1.msra.mxu0 %v1204
    %1232 = vmatprep.subr.mxu0 0.0
    %1233 = vmatpush1.msra.mxu0 %v1203
    %1234 = vmatprep.subr.mxu0 0.0
    %1235 = vmatpush1.msra.mxu0 %v1202
    %1236 = vmatprep.subr.mxu0 0.0
    %1237 = vmatpush1.msra.mxu0 %v1201
    %1238 = vmatprep.subr.mxu0 0.0
    %1239 = vmatpush1.msra.mxu0 %v1200
    %1240 = vmatprep.subr.mxu0 0.0
    %1241 = vmatpush1.msra.mxu0 %v1199
    %1242 = vmatprep.subr.mxu0 0.0
    %1243 = vmatpush1.msra.mxu0 %v1198
    %1244 = vmatprep.subr.mxu0 0.0
    %1245 = vmatpush1.msra.mxu0 %v1197
    %1246 = vmatprep.subr.mxu0 0.0
    %1247 = vmatpush1.msra.mxu0 %v1196
    %1248 = vmatprep.subr.mxu0 0.0
    %1249 = vmatpush1.msra.mxu0 %v1195
    %1250 = vmatprep.subr.mxu0 0.0
    %1251 = vmatpush2.msra.mxu0 0.0
    %1252 = vmatprep.subr.mxu0 0.0
    %1253 = vmatpush2.msra.mxu0 0.0
    %1254 = vmatprep.subr.mxu0 0.0
    %1255 = vmatpush2.msra.mxu0 0.0
    %1256 = vmatprep.subr.mxu0 0.0
    %1257 = vmatpush2.msra.mxu0 0.0
    %1258 = vmatprep.subr.mxu0 0.0
    %1259 = vmatpush2.msra.mxu0 0.0
    %1260 = vmatprep.subr.mxu0 0.0
    %1261 = vmatpush2.msra.mxu0 0.0
    %1262 = vmatprep.subr.mxu0 0.0
    %1263 = vmatpush2.msra.mxu0 0.0
    %1264 = vmatprep.subr.mxu0 0.0
    %1265 = vmatpush2.msra.mxu0 0.0
    %1266 = vmatprep.subr.mxu0 0.0
    %1267 = vmatpush2.msra.mxu0 0.0
    %1268 = vmatprep.subr.mxu0 0.0
    %1269 = vmatpush2.msra.mxu0 0.0
    %1270 = vmatprep.subr.mxu0 0.0
    %1271 = vmatpush2.msra.mxu0 0.0
    %1272 = vmatprep.subr.mxu0 0.0
    %1273 = vmatpush2.msra.mxu0 0.0
    %1274 = vmatprep.subr.mxu0 0.0
    %1275 = vmatpush2.msra.mxu0 0.0
    %1276 = vmatprep.subr.mxu0 0.0
    %1277 = vmatpush2.msra.mxu0 0.0
    %1278 = vmatprep.subr.mxu0 0.0
    %1279 = vmatpush2.msra.mxu0 0.0
    %1280 = vmatprep.subr.mxu0 0.0
    %1281 = vmatpush2.msra.mxu0 0.0
    %1282 = vmatprep.mubr.f32.mxu0 0.0
    %1283 = vmatmul.mubr.f32.gmra.mxu0 %v1194
    %v1284 = vpop.f32.mrf.mxu0
    %v1285 = vadd.f32 %v1216, %v1284
    %v1286 = vpop.f32.mrf.mxu0
    %1287 = vdwg.mxu0
    %vm1288 = vcmp.gt.f32.partialorder %v1285, 0.0
    %v1289 = vmul.f32 %v1285, 0.01
    %v1290 = vsel %vm1288, %v1285, %v1289
    %v1291 = vld [vmem:[#allocation20] sm:$0xff]
    %v1292 = vld [vmem:[#allocation20 + $0x8] sm:$0xff]
    %v1293 = vld [vmem:[#allocation20 + $0x10] sm:$0xff]
    %v1294 = vld [vmem:[#allocation20 + $0x18] sm:$0xff]
    %v1295 = vld [vmem:[#allocation20 + $0x20] sm:$0xff]
    %v1296 = vld [vmem:[#allocation20 + $0x28] sm:$0xff]
    %v1297 = vld [vmem:[#allocation20 + $0x30] sm:$0xff]
    %v1298 = vld [vmem:[#allocation20 + $0x38] sm:$0xff]
    %v1299 = vld [vmem:[#allocation20 + $0x40] sm:$0xff]
    %v1300 = vld [vmem:[#allocation20 + $0x48] sm:$0xff]
    %v1301 = vld [vmem:[#allocation20 + $0x50] sm:$0xff]
    %v1302 = vld [vmem:[#allocation20 + $0x58] sm:$0xff]
    %v1303 = vld [vmem:[#allocation20 + $0x60] sm:$0xff]
    %v1304 = vld [vmem:[#allocation20 + $0x68] sm:$0xff]
    %v1305 = vld [vmem:[#allocation20 + $0x70] sm:$0xff]
    %v1306 = vld [vmem:[#allocation20 + $0x78] sm:$0xff]
    %v1307 = vld [vmem:[%s41] sm:$0x1]
    %v1309 = vlaneseq
    %v1310 = vshrl.u32 %v1309, 7
    %v1311 = vsub.s32 0, %v1310
    %v1312 = vrot.slane %v1307, %v1311
    %1314 = vmatprep.subr.mxu0 0.0
    %1315 = vmatpush1.msra.mxu0 %v1306
    %1316 = vmatprep.subr.mxu0 0.0
    %1317 = vmatpush1.msra.mxu0 %v1305
    %1318 = vmatprep.subr.mxu0 0.0
    %1319 = vmatpush1.msra.mxu0 %v1304
    %1320 = vmatprep.subr.mxu0 0.0
    %1321 = vmatpush1.msra.mxu0 %v1303
    %1322 = vmatprep.subr.mxu0 0.0
    %1323 = vmatpush1.msra.mxu0 %v1302
    %1324 = vmatprep.subr.mxu0 0.0
    %1325 = vmatpush1.msra.mxu0 %v1301
    %1326 = vmatprep.subr.mxu0 0.0
    %1327 = vmatpush1.msra.mxu0 %v1300
    %1328 = vmatprep.subr.mxu0 0.0
    %1329 = vmatpush1.msra.mxu0 %v1299
    %1330 = vmatprep.subr.mxu0 0.0
    %1331 = vmatpush1.msra.mxu0 %v1298
    %1332 = vmatprep.subr.mxu0 0.0
    %1333 = vmatpush1.msra.mxu0 %v1297
    %1334 = vmatprep.subr.mxu0 0.0
    %1335 = vmatpush1.msra.mxu0 %v1296
    %1336 = vmatprep.subr.mxu0 0.0
    %1337 = vmatpush1.msra.mxu0 %v1295
    %1338 = vmatprep.subr.mxu0 0.0
    %1339 = vmatpush1.msra.mxu0 %v1294
    %1340 = vmatprep.subr.mxu0 0.0
    %1341 = vmatpush1.msra.mxu0 %v1293
    %1342 = vmatprep.subr.mxu0 0.0
    %1343 = vmatpush1.msra.mxu0 %v1292
    %1344 = vmatprep.subr.mxu0 0.0
    %1345 = vmatpush1.msra.mxu0 %v1291
    %1346 = vmatprep.subr.mxu0 0.0
    %1347 = vmatpush2.msra.mxu0 0.0
    %1348 = vmatprep.subr.mxu0 0.0
    %1349 = vmatpush2.msra.mxu0 0.0
    %1350 = vmatprep.subr.mxu0 0.0
    %1351 = vmatpush2.msra.mxu0 0.0
    %1352 = vmatprep.subr.mxu0 0.0
    %1353 = vmatpush2.msra.mxu0 0.0
    %1354 = vmatprep.subr.mxu0 0.0
    %1355 = vmatpush2.msra.mxu0 0.0
    %1356 = vmatprep.subr.mxu0 0.0
    %1357 = vmatpush2.msra.mxu0 0.0
    %1358 = vmatprep.subr.mxu0 0.0
    %1359 = vmatpush2.msra.mxu0 0.0
    %1360 = vmatprep.subr.mxu0 0.0
    %1361 = vmatpush2.msra.mxu0 0.0
    %1362 = vmatprep.subr.mxu0 0.0
    %1363 = vmatpush2.msra.mxu0 0.0
    %1364 = vmatprep.subr.mxu0 0.0
    %1365 = vmatpush2.msra.mxu0 0.0
    %1366 = vmatprep.subr.mxu0 0.0
    %1367 = vmatpush2.msra.mxu0 0.0
    %1368 = vmatprep.subr.mxu0 0.0
    %1369 = vmatpush2.msra.mxu0 0.0
    %1370 = vmatprep.subr.mxu0 0.0
    %1371 = vmatpush2.msra.mxu0 0.0
    %1372 = vmatprep.subr.mxu0 0.0
    %1373 = vmatpush2.msra.mxu0 0.0
    %1374 = vmatprep.subr.mxu0 0.0
    %1375 = vmatpush2.msra.mxu0 0.0
    %1376 = vmatprep.subr.mxu0 0.0
    %1377 = vmatpush2.msra.mxu0 0.0
    %1378 = vmatprep.mubr.f32.mxu0 0.0
    %1379 = vmatmul.mubr.f32.gmra.mxu0 %v1290
    %v1380 = vpop.f32.mrf.mxu0
    %v1381 = vadd.f32 %v1312, %v1380
    %v1382 = vpop.f32.mrf.mxu0
    %1383 = vdwg.mxu0
    %vm1384 = vcmp.gt.f32.partialorder %v1381, 0.0
    %v1385 = vmul.f32 %v1381, 0.01
    %v1386 = vsel %vm1384, %v1381, %v1385
    %v1387 = vld [vmem:[#allocation22] sm:$0xff]
    %v1388 = vld [vmem:[#allocation22 + $0x8] sm:$0xff]
    %v1389 = vld [vmem:[#allocation22 + $0x10] sm:$0xff]
    %v1390 = vld [vmem:[#allocation22 + $0x18] sm:$0xff]
    %v1391 = vld [vmem:[#allocation22 + $0x20] sm:$0xff]
    %v1392 = vld [vmem:[#allocation22 + $0x28] sm:$0xff]
    %v1393 = vld [vmem:[#allocation22 + $0x30] sm:$0xff]
    %v1394 = vld [vmem:[#allocation22 + $0x38] sm:$0xff]
    %v1395 = vld [vmem:[#allocation22 + $0x40] sm:$0xff]
    %v1396 = vld [vmem:[#allocation22 + $0x48] sm:$0xff]
    %v1397 = vld [vmem:[#allocation22 + $0x50] sm:$0xff]
    %v1398 = vld [vmem:[#allocation22 + $0x58] sm:$0xff]
    %v1399 = vld [vmem:[#allocation22 + $0x60] sm:$0xff]
    %v1400 = vld [vmem:[#allocation22 + $0x68] sm:$0xff]
    %v1401 = vld [vmem:[#allocation22 + $0x70] sm:$0xff]
    %v1402 = vld [vmem:[#allocation22 + $0x78] sm:$0xff]
    %v1403 = vld [vmem:[%s45] sm:$0x1]
    %v1405 = vlaneseq
    %v1406 = vshrl.u32 %v1405, 7
    %v1407 = vsub.s32 0, %v1406
    %v1408 = vrot.slane %v1403, %v1407
    %1410 = vmatprep.subr.mxu0 0.0
    %1411 = vmatpush1.msra.mxu0 %v1402
    %1412 = vmatprep.subr.mxu0 0.0
    %1413 = vmatpush1.msra.mxu0 %v1401
    %1414 = vmatprep.subr.mxu0 0.0
    %1415 = vmatpush1.msra.mxu0 %v1400
    %1416 = vmatprep.subr.mxu0 0.0
    %1417 = vmatpush1.msra.mxu0 %v1399
    %1418 = vmatprep.subr.mxu0 0.0
    %1419 = vmatpush1.msra.mxu0 %v1398
    %1420 = vmatprep.subr.mxu0 0.0
    %1421 = vmatpush1.msra.mxu0 %v1397
    %1422 = vmatprep.subr.mxu0 0.0
    %1423 = vmatpush1.msra.mxu0 %v1396
    %1424 = vmatprep.subr.mxu0 0.0
    %1425 = vmatpush1.msra.mxu0 %v1395
    %1426 = vmatprep.subr.mxu0 0.0
    %1427 = vmatpush1.msra.mxu0 %v1394
    %1428 = vmatprep.subr.mxu0 0.0
    %1429 = vmatpush1.msra.mxu0 %v1393
    %1430 = vmatprep.subr.mxu0 0.0
    %1431 = vmatpush1.msra.mxu0 %v1392
    %1432 = vmatprep.subr.mxu0 0.0
    %1433 = vmatpush1.msra.mxu0 %v1391
    %1434 = vmatprep.subr.mxu0 0.0
    %1435 = vmatpush1.msra.mxu0 %v1390
    %1436 = vmatprep.subr.mxu0 0.0
    %1437 = vmatpush1.msra.mxu0 %v1389
    %1438 = vmatprep.subr.mxu0 0.0
    %1439 = vmatpush1.msra.mxu0 %v1388
    %1440 = vmatprep.subr.mxu0 0.0
    %1441 = vmatpush1.msra.mxu0 %v1387
    %1442 = vmatprep.subr.mxu0 0.0
    %1443 = vmatpush2.msra.mxu0 0.0
    %1444 = vmatprep.subr.mxu0 0.0
    %1445 = vmatpush2.msra.mxu0 0.0
    %1446 = vmatprep.subr.mxu0 0.0
    %1447 = vmatpush2.msra.mxu0 0.0
    %1448 = vmatprep.subr.mxu0 0.0
    %1449 = vmatpush2.msra.mxu0 0.0
    %1450 = vmatprep.subr.mxu0 0.0
    %1451 = vmatpush2.msra.mxu0 0.0
    %1452 = vmatprep.subr.mxu0 0.0
    %1453 = vmatpush2.msra.mxu0 0.0
    %1454 = vmatprep.subr.mxu0 0.0
    %1455 = vmatpush2.msra.mxu0 0.0
    %1456 = vmatprep.subr.mxu0 0.0
    %1457 = vmatpush2.msra.mxu0 0.0
    %1458 = vmatprep.subr.mxu0 0.0
    %1459 = vmatpush2.msra.mxu0 0.0
    %1460 = vmatprep.subr.mxu0 0.0
    %1461 = vmatpush2.msra.mxu0 0.0
    %1462 = vmatprep.subr.mxu0 0.0
    %1463 = vmatpush2.msra.mxu0 0.0
    %1464 = vmatprep.subr.mxu0 0.0
    %1465 = vmatpush2.msra.mxu0 0.0
    %1466 = vmatprep.subr.mxu0 0.0
    %1467 = vmatpush2.msra.mxu0 0.0
    %1468 = vmatprep.subr.mxu0 0.0
    %1469 = vmatpush2.msra.mxu0 0.0
    %1470 = vmatprep.subr.mxu0 0.0
    %1471 = vmatpush2.msra.mxu0 0.0
    %1472 = vmatprep.subr.mxu0 0.0
    %1473 = vmatpush2.msra.mxu0 0.0
    %1474 = vmatprep.mubr.f32.mxu0 0.0
    %1475 = vmatmul.mubr.f32.gmra.mxu0 %v1386
    %v1476 = vpop.f32.mrf.mxu0
    %v1477 = vadd.f32 %v1408, %v1476
    %v1478 = vpop.f32.mrf.mxu0
    %1479 = vdwg.mxu0
    %v1480 = vld [vmem:[#allocation23] sm:$0xff]
    %v1481 = vld [vmem:[#allocation23 + $0x8] sm:$0xff]
    %v1482 = vld [vmem:[#allocation23 + $0x10] sm:$0xff]
    %v1483 = vld [vmem:[#allocation23 + $0x18] sm:$0xff]
    %v1484 = vld [vmem:[#allocation23 + $0x20] sm:$0xff]
    %v1485 = vld [vmem:[#allocation23 + $0x28] sm:$0xff]
    %v1486 = vld [vmem:[#allocation23 + $0x30] sm:$0xff]
    %v1487 = vld [vmem:[#allocation23 + $0x38] sm:$0xff]
    %v1488 = vld [vmem:[#allocation23 + $0x40] sm:$0xff]
    %v1489 = vld [vmem:[#allocation23 + $0x48] sm:$0xff]
    %v1490 = vld [vmem:[#allocation23 + $0x50] sm:$0xff]
    %v1491 = vld [vmem:[#allocation23 + $0x58] sm:$0xff]
    %v1492 = vld [vmem:[#allocation23 + $0x60] sm:$0xff]
    %v1493 = vld [vmem:[#allocation23 + $0x68] sm:$0xff]
    %v1494 = vld [vmem:[#allocation23 + $0x70] sm:$0xff]
    %v1495 = vld [vmem:[#allocation23 + $0x78] sm:$0xff]
    %v1496 = vld [vmem:[#allocation25] sm:$0xff]
    %v1497 = vld [vmem:[#allocation25 + $0x8] sm:$0xff]
    %v1498 = vld [vmem:[#allocation25 + $0x10] sm:$0xff]
    %v1499 = vld [vmem:[#allocation25 + $0x18] sm:$0xff]
    %v1500 = vld [vmem:[#allocation25 + $0x20] sm:$0xff]
    %v1501 = vld [vmem:[#allocation25 + $0x28] sm:$0xff]
    %v1502 = vld [vmem:[#allocation25 + $0x30] sm:$0xff]
    %v1503 = vld [vmem:[#allocation25 + $0x38] sm:$0xff]
    %v1504 = vld [vmem:[#allocation25 + $0x40] sm:$0xff]
    %v1505 = vld [vmem:[#allocation25 + $0x48] sm:$0xff]
    %v1506 = vld [vmem:[#allocation25 + $0x50] sm:$0xff]
    %v1507 = vld [vmem:[#allocation25 + $0x58] sm:$0xff]
    %v1508 = vld [vmem:[#allocation25 + $0x60] sm:$0xff]
    %v1509 = vld [vmem:[#allocation25 + $0x68] sm:$0xff]
    %v1510 = vld [vmem:[#allocation25 + $0x70] sm:$0xff]
    %v1511 = vld [vmem:[#allocation25 + $0x78] sm:$0xff]
    %1512 = vmatprep.subr.mxu0 0.0
    %1513 = vmatpush1.msra.mxu0 %v1511
    %1514 = vmatprep.subr.mxu0 0.0
    %1515 = vmatpush1.msra.mxu0 %v1510
    %1516 = vmatprep.subr.mxu0 0.0
    %1517 = vmatpush1.msra.mxu0 %v1509
    %1518 = vmatprep.subr.mxu0 0.0
    %1519 = vmatpush1.msra.mxu0 %v1508
    %1520 = vmatprep.subr.mxu0 0.0
    %1521 = vmatpush1.msra.mxu0 %v1507
    %1522 = vmatprep.subr.mxu0 0.0
    %1523 = vmatpush1.msra.mxu0 %v1506
    %1524 = vmatprep.subr.mxu0 0.0
    %1525 = vmatpush1.msra.mxu0 %v1505
    %1526 = vmatprep.subr.mxu0 0.0
    %1527 = vmatpush1.msra.mxu0 %v1504
    %1528 = vmatprep.subr.mxu0 0.0
    %1529 = vmatpush1.msra.mxu0 %v1503
    %1530 = vmatprep.subr.mxu0 0.0
    %1531 = vmatpush1.msra.mxu0 %v1502
    %1532 = vmatprep.subr.mxu0 0.0
    %1533 = vmatpush1.msra.mxu0 %v1501
    %1534 = vmatprep.subr.mxu0 0.0
    %1535 = vmatpush1.msra.mxu0 %v1500
    %1536 = vmatprep.subr.mxu0 0.0
    %1537 = vmatpush1.msra.mxu0 %v1499
    %1538 = vmatprep.subr.mxu0 0.0
    %1539 = vmatpush1.msra.mxu0 %v1498
    %1540 = vmatprep.subr.mxu0 0.0
    %1541 = vmatpush1.msra.mxu0 %v1497
    %1542 = vmatprep.subr.mxu0 0.0
    %1543 = vmatpush1.msra.mxu0 %v1496
    %1544 = vmatprep.subr.mxu0 0.0
    %1545 = vmatpush2.msra.mxu0 0.0
    %1546 = vmatprep.subr.mxu0 0.0
    %1547 = vmatpush2.msra.mxu0 0.0
    %1548 = vmatprep.subr.mxu0 0.0
    %1549 = vmatpush2.msra.mxu0 0.0
    %1550 = vmatprep.subr.mxu0 0.0
    %1551 = vmatpush2.msra.mxu0 0.0
    %1552 = vmatprep.subr.mxu0 0.0
    %1553 = vmatpush2.msra.mxu0 0.0
    %1554 = vmatprep.subr.mxu0 0.0
    %1555 = vmatpush2.msra.mxu0 0.0
    %1556 = vmatprep.subr.mxu0 0.0
    %1557 = vmatpush2.msra.mxu0 0.0
    %1558 = vmatprep.subr.mxu0 0.0
    %1559 = vmatpush2.msra.mxu0 0.0
    %1560 = vmatprep.subr.mxu0 0.0
    %1561 = vmatpush2.msra.mxu0 0.0
    %1562 = vmatprep.subr.mxu0 0.0
    %1563 = vmatpush2.msra.mxu0 0.0
    %1564 = vmatprep.subr.mxu0 0.0
    %1565 = vmatpush2.msra.mxu0 0.0
    %1566 = vmatprep.subr.mxu0 0.0
    %1567 = vmatpush2.msra.mxu0 0.0
    %1568 = vmatprep.subr.mxu0 0.0
    %1569 = vmatpush2.msra.mxu0 0.0
    %1570 = vmatprep.subr.mxu0 0.0
    %1571 = vmatpush2.msra.mxu0 0.0
    %1572 = vmatprep.subr.mxu0 0.0
    %1573 = vmatpush2.msra.mxu0 0.0
    %1574 = vmatprep.subr.mxu0 0.0
    %1575 = vmatpush2.msra.mxu0 0.0
    %1576 = vmatprep.mubr.f32.mxu0 0.0
    %1577 = vmatmul.mubr.f32.gmra.mxu0 %v1290
    %v1578 = vpop.f32.mrf.mxu0
    %v1579 = vadd.f32 0.0, %v1578
    %v1580 = vpop.f32.mrf.mxu0
    %1581 = vdwg.mxu0
    %1582 = vmatprep.subr.mxu0 0.0
    %1583 = vmatpush1.msra.mxu0 %v1495
    %1584 = vmatprep.subr.mxu0 0.0
    %1585 = vmatpush1.msra.mxu0 %v1494
    %1586 = vmatprep.subr.mxu0 0.0
    %1587 = vmatpush1.msra.mxu0 %v1493
    %1588 = vmatprep.subr.mxu0 0.0
    %1589 = vmatpush1.msra.mxu0 %v1492
    %1590 = vmatprep.subr.mxu0 0.0
    %1591 = vmatpush1.msra.mxu0 %v1491
    %1592 = vmatprep.subr.mxu0 0.0
    %1593 = vmatpush1.msra.mxu0 %v1490
    %1594 = vmatprep.subr.mxu0 0.0
    %1595 = vmatpush1.msra.mxu0 %v1489
    %1596 = vmatprep.subr.mxu0 0.0
    %1597 = vmatpush1.msra.mxu0 %v1488
    %1598 = vmatprep.subr.mxu0 0.0
    %1599 = vmatpush1.msra.mxu0 %v1487
    %1600 = vmatprep.subr.mxu0 0.0
    %1601 = vmatpush1.msra.mxu0 %v1486
    %1602 = vmatprep.subr.mxu0 0.0
    %1603 = vmatpush1.msra.mxu0 %v1485
    %1604 = vmatprep.subr.mxu0 0.0
    %1605 = vmatpush1.msra.mxu0 %v1484
    %1606 = vmatprep.subr.mxu0 0.0
    %1607 = vmatpush1.msra.mxu0 %v1483
    %1608 = vmatprep.subr.mxu0 0.0
    %1609 = vmatpush1.msra.mxu0 %v1482
    %1610 = vmatprep.subr.mxu0 0.0
    %1611 = vmatpush1.msra.mxu0 %v1481
    %1612 = vmatprep.subr.mxu0 0.0
    %1613 = vmatpush1.msra.mxu0 %v1480
    %1614 = vmatprep.subr.mxu0 0.0
    %1615 = vmatpush2.msra.mxu0 0.0
    %1616 = vmatprep.subr.mxu0 0.0
    %1617 = vmatpush2.msra.mxu0 0.0
    %1618 = vmatprep.subr.mxu0 0.0
    %1619 = vmatpush2.msra.mxu0 0.0
    %1620 = vmatprep.subr.mxu0 0.0
    %1621 = vmatpush2.msra.mxu0 0.0
    %1622 = vmatprep.subr.mxu0 0.0
    %1623 = vmatpush2.msra.mxu0 0.0
    %1624 = vmatprep.subr.mxu0 0.0
    %1625 = vmatpush2.msra.mxu0 0.0
    %1626 = vmatprep.subr.mxu0 0.0
    %1627 = vmatpush2.msra.mxu0 0.0
    %1628 = vmatprep.subr.mxu0 0.0
    %1629 = vmatpush2.msra.mxu0 0.0
    %1630 = vmatprep.subr.mxu0 0.0
    %1631 = vmatpush2.msra.mxu0 0.0
    %1632 = vmatprep.subr.mxu0 0.0
    %1633 = vmatpush2.msra.mxu0 0.0
    %1634 = vmatprep.subr.mxu0 0.0
    %1635 = vmatpush2.msra.mxu0 0.0
    %1636 = vmatprep.subr.mxu0 0.0
    %1637 = vmatpush2.msra.mxu0 0.0
    %1638 = vmatprep.subr.mxu0 0.0
    %1639 = vmatpush2.msra.mxu0 0.0
    %1640 = vmatprep.subr.mxu0 0.0
    %1641 = vmatpush2.msra.mxu0 0.0
    %1642 = vmatprep.subr.mxu0 0.0
    %1643 = vmatpush2.msra.mxu0 0.0
    %1644 = vmatprep.subr.mxu0 0.0
    %1645 = vmatpush2.msra.mxu0 0.0
    %1646 = vmatprep.mubr.f32.mxu0 0.0
    %1647 = vmatmul.mubr.f32.gmra.mxu0 %v1477
    %v1648 = vpop.f32.mrf.mxu0
    %v1649 = vadd.f32 %v1579, %v1648
    %v1650 = vpop.f32.mrf.mxu0
    %1651 = vdwg.mxu0
    %v1652 = vld [vmem:[%s51] sm:$0x1]
    %v1654 = vlaneseq
    %v1655 = vshrl.u32 %v1654, 7
    %v1656 = vsub.s32 0, %v1655
    %v1657 = vrot.slane %v1652, %v1656
    %v1659 = vadd.f32 %v1649, %v1657
    %vm1660 = vcmp.gt.f32.partialorder %v1659, 0.0
    %v1661 = vmul.f32 %v1659, 0.01
    %v1662 = vsel %vm1660, %v1659, %v1661
    %v1663 = vld [vmem:[#allocation26] sm:$0xff]
    %v1664 = vld [vmem:[#allocation26 + $0x8] sm:$0xff]
    %v1665 = vld [vmem:[#allocation26 + $0x10] sm:$0xff]
    %v1666 = vld [vmem:[#allocation26 + $0x18] sm:$0xff]
    %v1667 = vld [vmem:[#allocation26 + $0x20] sm:$0xff]
    %v1668 = vld [vmem:[#allocation26 + $0x28] sm:$0xff]
    %v1669 = vld [vmem:[#allocation26 + $0x30] sm:$0xff]
    %v1670 = vld [vmem:[#allocation26 + $0x38] sm:$0xff]
    %v1671 = vld [vmem:[#allocation26 + $0x40] sm:$0xff]
    %v1672 = vld [vmem:[#allocation26 + $0x48] sm:$0xff]
    %v1673 = vld [vmem:[#allocation26 + $0x50] sm:$0xff]
    %v1674 = vld [vmem:[#allocation26 + $0x58] sm:$0xff]
    %v1675 = vld [vmem:[#allocation26 + $0x60] sm:$0xff]
    %v1676 = vld [vmem:[#allocation26 + $0x68] sm:$0xff]
    %v1677 = vld [vmem:[#allocation26 + $0x70] sm:$0xff]
    %v1678 = vld [vmem:[#allocation26 + $0x78] sm:$0xff]
    %v1679 = vld [vmem:[#allocation28] sm:$0xff]
    %v1680 = vld [vmem:[#allocation28 + $0x8] sm:$0xff]
    %v1681 = vld [vmem:[#allocation28 + $0x10] sm:$0xff]
    %v1682 = vld [vmem:[#allocation28 + $0x18] sm:$0xff]
    %v1683 = vld [vmem:[#allocation28 + $0x20] sm:$0xff]
    %v1684 = vld [vmem:[#allocation28 + $0x28] sm:$0xff]
    %v1685 = vld [vmem:[#allocation28 + $0x30] sm:$0xff]
    %v1686 = vld [vmem:[#allocation28 + $0x38] sm:$0xff]
    %v1687 = vld [vmem:[#allocation28 + $0x40] sm:$0xff]
    %v1688 = vld [vmem:[#allocation28 + $0x48] sm:$0xff]
    %v1689 = vld [vmem:[#allocation28 + $0x50] sm:$0xff]
    %v1690 = vld [vmem:[#allocation28 + $0x58] sm:$0xff]
    %v1691 = vld [vmem:[#allocation28 + $0x60] sm:$0xff]
    %v1692 = vld [vmem:[#allocation28 + $0x68] sm:$0xff]
    %v1693 = vld [vmem:[#allocation28 + $0x70] sm:$0xff]
    %v1694 = vld [vmem:[#allocation28 + $0x78] sm:$0xff]
    %1695 = vmatprep.subr.mxu0 0.0
    %1696 = vmatpush1.msra.mxu0 %v1694
    %1697 = vmatprep.subr.mxu0 0.0
    %1698 = vmatpush1.msra.mxu0 %v1693
    %1699 = vmatprep.subr.mxu0 0.0
    %1700 = vmatpush1.msra.mxu0 %v1692
    %1701 = vmatprep.subr.mxu0 0.0
    %1702 = vmatpush1.msra.mxu0 %v1691
    %1703 = vmatprep.subr.mxu0 0.0
    %1704 = vmatpush1.msra.mxu0 %v1690
    %1705 = vmatprep.subr.mxu0 0.0
    %1706 = vmatpush1.msra.mxu0 %v1689
    %1707 = vmatprep.subr.mxu0 0.0
    %1708 = vmatpush1.msra.mxu0 %v1688
    %1709 = vmatprep.subr.mxu0 0.0
    %1710 = vmatpush1.msra.mxu0 %v1687
    %1711 = vmatprep.subr.mxu0 0.0
    %1712 = vmatpush1.msra.mxu0 %v1686
    %1713 = vmatprep.subr.mxu0 0.0
    %1714 = vmatpush1.msra.mxu0 %v1685
    %1715 = vmatprep.subr.mxu0 0.0
    %1716 = vmatpush1.msra.mxu0 %v1684
    %1717 = vmatprep.subr.mxu0 0.0
    %1718 = vmatpush1.msra.mxu0 %v1683
    %1719 = vmatprep.subr.mxu0 0.0
    %1720 = vmatpush1.msra.mxu0 %v1682
    %1721 = vmatprep.subr.mxu0 0.0
    %1722 = vmatpush1.msra.mxu0 %v1681
    %1723 = vmatprep.subr.mxu0 0.0
    %1724 = vmatpush1.msra.mxu0 %v1680
    %1725 = vmatprep.subr.mxu0 0.0
    %1726 = vmatpush1.msra.mxu0 %v1679
    %1727 = vmatprep.subr.mxu0 0.0
    %1728 = vmatpush2.msra.mxu0 0.0
    %1729 = vmatprep.subr.mxu0 0.0
    %1730 = vmatpush2.msra.mxu0 0.0
    %1731 = vmatprep.subr.mxu0 0.0
    %1732 = vmatpush2.msra.mxu0 0.0
    %1733 = vmatprep.subr.mxu0 0.0
    %1734 = vmatpush2.msra.mxu0 0.0
    %1735 = vmatprep.subr.mxu0 0.0
    %1736 = vmatpush2.msra.mxu0 0.0
    %1737 = vmatprep.subr.mxu0 0.0
    %1738 = vmatpush2.msra.mxu0 0.0
    %1739 = vmatprep.subr.mxu0 0.0
    %1740 = vmatpush2.msra.mxu0 0.0
    %1741 = vmatprep.subr.mxu0 0.0
    %1742 = vmatpush2.msra.mxu0 0.0
    %1743 = vmatprep.subr.mxu0 0.0
    %1744 = vmatpush2.msra.mxu0 0.0
    %1745 = vmatprep.subr.mxu0 0.0
    %1746 = vmatpush2.msra.mxu0 0.0
    %1747 = vmatprep.subr.mxu0 0.0
    %1748 = vmatpush2.msra.mxu0 0.0
    %1749 = vmatprep.subr.mxu0 0.0
    %1750 = vmatpush2.msra.mxu0 0.0
    %1751 = vmatprep.subr.mxu0 0.0
    %1752 = vmatpush2.msra.mxu0 0.0
    %1753 = vmatprep.subr.mxu0 0.0
    %1754 = vmatpush2.msra.mxu0 0.0
    %1755 = vmatprep.subr.mxu0 0.0
    %1756 = vmatpush2.msra.mxu0 0.0
    %1757 = vmatprep.subr.mxu0 0.0
    %1758 = vmatpush2.msra.mxu0 0.0
    %1759 = vmatprep.mubr.f32.mxu0 0.0
    %1760 = vmatmul.mubr.f32.gmra.mxu0 %v1194
    %v1761 = vpop.f32.mrf.mxu0
    %v1762 = vadd.f32 0.0, %v1761
    %v1763 = vpop.f32.mrf.mxu0
    %1764 = vdwg.mxu0
    %1765 = vmatprep.subr.mxu0 0.0
    %1766 = vmatpush1.msra.mxu0 %v1678
    %1767 = vmatprep.subr.mxu0 0.0
    %1768 = vmatpush1.msra.mxu0 %v1677
    %1769 = vmatprep.subr.mxu0 0.0
    %1770 = vmatpush1.msra.mxu0 %v1676
    %1771 = vmatprep.subr.mxu0 0.0
    %1772 = vmatpush1.msra.mxu0 %v1675
    %1773 = vmatprep.subr.mxu0 0.0
    %1774 = vmatpush1.msra.mxu0 %v1674
    %1775 = vmatprep.subr.mxu0 0.0
    %1776 = vmatpush1.msra.mxu0 %v1673
    %1777 = vmatprep.subr.mxu0 0.0
    %1778 = vmatpush1.msra.mxu0 %v1672
    %1779 = vmatprep.subr.mxu0 0.0
    %1780 = vmatpush1.msra.mxu0 %v1671
    %1781 = vmatprep.subr.mxu0 0.0
    %1782 = vmatpush1.msra.mxu0 %v1670
    %1783 = vmatprep.subr.mxu0 0.0
    %1784 = vmatpush1.msra.mxu0 %v1669
    %1785 = vmatprep.subr.mxu0 0.0
    %1786 = vmatpush1.msra.mxu0 %v1668
    %1787 = vmatprep.subr.mxu0 0.0
    %1788 = vmatpush1.msra.mxu0 %v1667
    %1789 = vmatprep.subr.mxu0 0.0
    %1790 = vmatpush1.msra.mxu0 %v1666
    %1791 = vmatprep.subr.mxu0 0.0
    %1792 = vmatpush1.msra.mxu0 %v1665
    %1793 = vmatprep.subr.mxu0 0.0
    %1794 = vmatpush1.msra.mxu0 %v1664
    %1795 = vmatprep.subr.mxu0 0.0
    %1796 = vmatpush1.msra.mxu0 %v1663
    %1797 = vmatprep.subr.mxu0 0.0
    %1798 = vmatpush2.msra.mxu0 0.0
    %1799 = vmatprep.subr.mxu0 0.0
    %1800 = vmatpush2.msra.mxu0 0.0
    %1801 = vmatprep.subr.mxu0 0.0
    %1802 = vmatpush2.msra.mxu0 0.0
    %1803 = vmatprep.subr.mxu0 0.0
    %1804 = vmatpush2.msra.mxu0 0.0
    %1805 = vmatprep.subr.mxu0 0.0
    %1806 = vmatpush2.msra.mxu0 0.0
    %1807 = vmatprep.subr.mxu0 0.0
    %1808 = vmatpush2.msra.mxu0 0.0
    %1809 = vmatprep.subr.mxu0 0.0
    %1810 = vmatpush2.msra.mxu0 0.0
    %1811 = vmatprep.subr.mxu0 0.0
    %1812 = vmatpush2.msra.mxu0 0.0
    %1813 = vmatprep.subr.mxu0 0.0
    %1814 = vmatpush2.msra.mxu0 0.0
    %1815 = vmatprep.subr.mxu0 0.0
    %1816 = vmatpush2.msra.mxu0 0.0
    %1817 = vmatprep.subr.mxu0 0.0
    %1818 = vmatpush2.msra.mxu0 0.0
    %1819 = vmatprep.subr.mxu0 0.0
    %1820 = vmatpush2.msra.mxu0 0.0
    %1821 = vmatprep.subr.mxu0 0.0
    %1822 = vmatpush2.msra.mxu0 0.0
    %1823 = vmatprep.subr.mxu0 0.0
    %1824 = vmatpush2.msra.mxu0 0.0
    %1825 = vmatprep.subr.mxu0 0.0
    %1826 = vmatpush2.msra.mxu0 0.0
    %1827 = vmatprep.subr.mxu0 0.0
    %1828 = vmatpush2.msra.mxu0 0.0
    %1829 = vmatprep.mubr.f32.mxu0 0.0
    %1830 = vmatmul.mubr.f32.gmra.mxu0 %v1662
    %v1831 = vpop.f32.mrf.mxu0
    %v1832 = vadd.f32 %v1762, %v1831
    %v1833 = vpop.f32.mrf.mxu0
    %1834 = vdwg.mxu0
    %v1835 = vld [vmem:[%s57] sm:$0x1]
    %v1837 = vlaneseq
    %v1838 = vshrl.u32 %v1837, 7
    %v1839 = vsub.s32 0, %v1838
    %v1840 = vrot.slane %v1835, %v1839
    %v1842 = vadd.f32 %v1832, %v1840
    %v1843 = vmax.f32 %v1842, 0.0
    %s1844 = scalar_lea.vmem [#allocation29], 8
    %1845 = vst [vmem:[%s1844] sm:$0xff] %v1843
    // Predicated region
    $region186: #{tpu_custom_call.1} parent=1 // pred_check
      _
    $region187: #{tpu_custom_call.1} parent=1 // pred_check_branch
      %1847 = sbr.rel (0) target = $region189
    $region188: #{tpu_custom_call.1} parent=1 // pred_region
      %s1849 = ssub.s32 256, 256
      %1850 = vsyncadd [#allocation4], %s1849
      %s1851 = sshll.u32 [#allocation29], 4
      %s1852 = int_to_ptr.vmem [resolvable:$true] %s1851
      %1857 = dma.vmem_to_hbm [thread:$0]  %s1852, 256, %s59, [#allocation4], 128, 128, 8
    $region189: #{tpu_custom_call.1} parent=1 // pred_fallthru
      _
    // Predicated region
    $region190: #{tpu_custom_call.1} parent=1 // pred_check
      _
    $region191: #{tpu_custom_call.1} parent=1 // pred_check_branch
      %1859 = sbr.rel (0) target = $region193
    $region192: #{tpu_custom_call.1} parent=1 // pred_region
      %1860 = dma.done [#allocation4], 256
    $region193: #{tpu_custom_call.1} parent=1 // pred_fallthru
      _
    %1861 = vsyncpa [#allocation3], 1
    %1862 = vsyncpa [#allocation6], 1
    %1863 = vsyncpa [#allocation9], 1
    %1864 = vsyncpa [#allocation12], 1
    %1865 = vsyncpa [#allocation15], 1
    %1866 = vsyncpa [#allocation18], 1
    %1867 = vsyncpa [#allocation21], 1
    %1868 = vsyncpa [#allocation24], 1
    %1869 = vsyncpa [#allocation27], 1
    %1870 = vsyncpa [#allocation4], 1

</llo_original>
